<compile_context>
chip_gen: v7x
topology: tpu7x:2x2x1
jax: 0.10.0
libtpu: 0.0.40
codegen_flags: <defaults>
</compile_context>

<pallas_src>
import jax
import jax.numpy as jnp
from jax.experimental import pallas as pl
from jax.experimental.pallas import tpu as pltpu


def _conv1x1_kernel(w_ref, x_ref, o_ref):
    # w_ref: (Cout, Cin) f32 weights (resident across the whole grid)
    # x_ref: (Cin, HW)   f32 activations for the current batch element
    # o_ref: (Cout, HW)  f32 output tile
    o_ref[...] = jnp.dot(
        w_ref[...], x_ref[...], preferred_element_type=jnp.float32
    )


def conv2d_1x1(x_nchw: jax.Array, w2d: jax.Array) -> jax.Array:
    """1x1 conv, stride 1, no bias, NCHW in / NCHW out.

    x_nchw: (N, Cin, H, W) float32
    w2d:    (Cout, Cin)    float32 (PyTorch (Cout, Cin, 1, 1) weight, squeezed)
    returns (N, Cout, H, W) float32
    """
    N, Cin, H, W = x_nchw.shape
    Cout = w2d.shape[0]
    HW = H * W

    x3d = x_nchw.reshape(N, Cin, HW)  # free reshape, no data movement

    flops = 2 * N * Cout * Cin * HW
    bytes_accessed = (
        Cout * Cin * 4          # weight, fetched once
        + N * Cin * HW * 4      # activations
        + N * Cout * HW * 4     # output writeback
    )

    out = pl.pallas_call(
        _conv1x1_kernel,
        out_shape=jax.ShapeDtypeStruct((N, Cout, HW), jnp.float32),
        grid=(N,),
        in_specs=[
            # Full weight as a single block; constant block index -> one DMA total.
            pl.BlockSpec((Cout, Cin), lambda n: (0, 0)),
            # Per-batch activation slab; batch dim squeezed out of the kernel ref.
            pl.BlockSpec((None, Cin, HW), lambda n: (n, 0, 0)),
        ],
        out_specs=pl.BlockSpec((None, Cout, HW), lambda n: (n, 0, 0)),
        compiler_params=pltpu.CompilerParams(
            dimension_semantics=("parallel",),
        ),
        cost_estimate=pl.CostEstimate(
            flops=flops, transcendentals=0, bytes_accessed=bytes_accessed
        ),
    )(w2d, x3d)

    return out.reshape(N, Cout, H, W)


conv2d_1x1_jit = jax.jit(conv2d_1x1)


if __name__ == "__main__":
    # Shapes implied by the module: Conv2d(184 -> 1104, 1x1), input (1, 184, 7, 7)
    N, Cin, H, W = 1, 184, 7, 7
    Cout = 1104

    key = jax.random.PRNGKey(0)
    kx, kw = jax.random.split(key)

    x = jax.random.normal(kx, (N, Cin, H, W), dtype=jnp.float32)
    # Deterministic weight init (kaiming-uniform-like bound, nn.Conv2d default)
    fan_in = Cin * 1 * 1
    bound = 1.0 / (fan_in ** 0.5)
    weight = jax.random.uniform(
        kw, (Cout, Cin, 1, 1), minval=-bound, maxval=bound, dtype=jnp.float32
    )

    # Init-time weight prep: squeeze (Cout, Cin, 1, 1) -> (Cout, Cin) once.
    w2d = weight.reshape(Cout, Cin)

    y = conv2d_1x1_jit(x, w2d)
    jax.block_until_ready(y)

    # Reference: plain-JAX f32 1x1 conv. Tolerance covers MXU default-precision
    # matmul behavior on TPU.
    ref = jnp.einsum("nchw,oc->nohw", x, w2d)
    assert y.shape == (N, Cout, H, W), y.shape
    assert jnp.allclose(y, ref, atol=2e-2, rtol=2e-2), (
        float(jnp.max(jnp.abs(y - ref)))
    )

    print("KERNEL_OK")
</pallas_src>

<mosaic_0001>
module attributes {stable_mosaic.version = 11 : i64} {
  func.func @_conv1x1_kernel(%arg0: i32, %arg1: memref<1104x184xf32, #tpu.memory_space<vmem>>, %arg2: memref<1x184x49xf32, #tpu.memory_space<vmem>>, %arg3: memref<1x1104x49xf32, #tpu.memory_space<vmem>>) attributes {dimension_semantics = [#tpu.dimension_semantics<parallel>], iteration_bounds = array<i64: 1>, scalar_prefetch = 0 : i64, scratch_operands = 0 : i64, tpu.core_type = #tpu.core_type<tc>, window_params = [{pipeline_mode = #tpu.pipeline_mode<synchronous>, transform_indices = @transform_0, window_bounds = array<i64: 1104, 184>}, {transform_indices = @transform_1, window_bounds = array<i64: 1, 184, 49>}, {transform_indices = @transform_2, window_bounds = array<i64: 1, 1104, 49>}]} {
    %c0 = arith.constant 0 : index
    %c0_0 = arith.constant 0 : index
    %0 = vector.load %arg1[%c0, %c0_0] : memref<1104x184xf32, #tpu.memory_space<vmem>>, vector<1104x184xf32>
    %c0_1 = arith.constant 0 : index
    %c0_2 = arith.constant 0 : index
    %c0_3 = arith.constant 0 : index
    %1 = vector.load %arg2[%c0_1, %c0_2, %c0_3] : memref<1x184x49xf32, #tpu.memory_space<vmem>>, vector<1x184x49xf32>
    %2 = vector.shape_cast %1 : vector<1x184x49xf32> to vector<184x49xf32>
    %cst = arith.constant dense<0.000000e+00> : vector<1104x49xf32>
    %3 = tpu.matmul %0, %2, %cst {dimension_numbers = #tpu.dot_dimension_numbers<[1], [0], [0], [1], [0, 0, 1, 1], [], []>} : vector<1104x184xf32>, vector<184x49xf32>, vector<1104x49xf32> -> vector<1104x49xf32>
    %c0_4 = arith.constant 0 : index
    %c0_5 = arith.constant 0 : index
    %c0_6 = arith.constant 0 : index
    %4 = vector.load %arg3[%c0_4, %c0_5, %c0_6] : memref<1x1104x49xf32, #tpu.memory_space<vmem>>, vector<1x1104x49xf32>
    %5 = vector.shape_cast %4 : vector<1x1104x49xf32> to vector<1104x49xf32>
    %6 = vector.shape_cast %3 : vector<1104x49xf32> to vector<1x1104x49xf32>
    tpu.vector_store %arg3[%c0_4, %c0_5, %c0_6], %6 {strides = array<i32>} : memref<1x1104x49xf32, #tpu.memory_space<vmem>>, vector<1x1104x49xf32>,
    return
  }
  func.func @transform_0(%arg0: i32) -> (i32, i32) {
    %c0_i32 = arith.constant 0 : i32
    %c0_i32_0 = arith.constant 0 : i32
    %c0_i32_1 = arith.constant 0 : i32
    return %c0_i32, %c0_i32_0 : i32, i32
  }
  func.func @transform_1(%arg0: i32) -> (i32, i32, i32) {
    %c0_i32 = arith.constant 0 : i32
    %c0_i32_0 = arith.constant 0 : i32
    %c0_i32_1 = arith.constant 0 : i32
    return %arg0, %c0_i32, %c0_i32_0 : i32, i32, i32
  }
  func.func @transform_2(%arg0: i32) -> (i32, i32, i32) {
    %c0_i32 = arith.constant 0 : i32
    %c0_i32_0 = arith.constant 0 : i32
    %c0_i32_1 = arith.constant 0 : i32
    return %arg0, %c0_i32, %c0_i32_0 : i32, i32, i32
  }
}

</mosaic_0001>

<llo_original>
// kernel: conv2d_1x1.1
$region0: #{conv2d_1x1.1}
  #allocation0 [shape = 'u32[]', space=smem, size = 0x4, offset = 0x4, fixed_abs, tag = 'smem constant byte address 0x4 - core index']
  #allocation1 [shape = 'u32[144,128]{1,0:T(1,128)}', space=vmem, size = 0x12000, scoped, tag = 'internal scratch']
  %s0 = inlined_call_operand.vmem [shape: f32[1104,184], index: 0, kind: input, shape index: {}]
  %s1 = inlined_call_operand.vmem [shape: f32[1,184,49], index: 1, kind: input, shape index: {}]
  %s2 = inlined_call_operand.vmem [shape: f32[1,1104,49], index: 2, kind: output, shape index: {}]
  %s3 = sld [smem:[#allocation0]]
  $region18: #{conv2d_1x1.1} parent=0
    _
  %s5 = ssub.s32 1, %s3
  %s6 = scalar_select 0, %s5, %s3
  // Predicated region
  $region2: #{conv2d_1x1.1} parent=0 // pred_check
    _
  $region3: #{conv2d_1x1.1} parent=0 // pred_check_branch
    %8 = sbr.rel (0) target = $region5
  $region4: #{conv2d_1x1.1} parent=0 // pred_region
    _
  $region5: #{conv2d_1x1.1} parent=0 // pred_fallthru
    _
  // Predicated region
  $region6: #{conv2d_1x1.1} parent=0 // pred_check
    _
  $region7: #{conv2d_1x1.1} parent=0 // pred_check_branch
    %10 = sbr.rel (0) target = $region9
  $region8: #{conv2d_1x1.1} parent=0 // pred_region
    _
  $region9: #{conv2d_1x1.1} parent=0 // pred_fallthru
    _
  %v11 = vld [vmem:[%s0] sm:$0xff]
  %v12 = vld [vmem:[%s0 + $0x8] sm:$0xff]
  %v13 = vld [vmem:[%s0 + $0x10] sm:$0xff]
  %v14 = vld [vmem:[%s0 + $0x18] sm:$0xff]
  %v15 = vld [vmem:[%s0 + $0x20] sm:$0xff]
  %v16 = vld [vmem:[%s0 + $0x28] sm:$0xff]
  %v17 = vld [vmem:[%s0 + $0x30] sm:$0xff]
  %v18 = vld [vmem:[%s0 + $0x38] sm:$0xff]
  %v19 = vld [vmem:[%s0 + $0x40] sm:$0xff]
  %v20 = vld [vmem:[%s0 + $0x48] sm:$0xff]
  %v21 = vld [vmem:[%s0 + $0x50] sm:$0xff]
  %v22 = vld [vmem:[%s0 + $0x58] sm:$0xff]
  %v23 = vld [vmem:[%s0 + $0x60] sm:$0xff]
  %v24 = vld [vmem:[%s0 + $0x68] sm:$0xff]
  %v25 = vld [vmem:[%s0 + $0x70] sm:$0xff]
  %v26 = vld [vmem:[%s0 + $0x78] sm:$0xff]
  %v27 = vld [vmem:[%s0 + $0x80] sm:$0xff]
  %v28 = vld [vmem:[%s0 + $0x88] sm:$0xff]
  %v29 = vld [vmem:[%s0 + $0x90] sm:$0xff]
  %v30 = vld [vmem:[%s0 + $0x98] sm:$0xff]
  %v31 = vld [vmem:[%s0 + $0xa0] sm:$0xff]
  %v32 = vld [vmem:[%s0 + $0xa8] sm:$0xff]
  %v33 = vld [vmem:[%s0 + $0xb0] sm:$0xff]
  %v34 = vld [vmem:[%s0 + $0xb8] sm:$0xff]
  %v35 = vld [vmem:[%s0 + $0xc0] sm:$0xff]
  %v36 = vld [vmem:[%s0 + $0xc8] sm:$0xff]
  %v37 = vld [vmem:[%s0 + $0xd0] sm:$0xff]
  %v38 = vld [vmem:[%s0 + $0xd8] sm:$0xff]
  %v39 = vld [vmem:[%s0 + $0xe0] sm:$0xff]
  %v40 = vld [vmem:[%s0 + $0xe8] sm:$0xff]
  %v41 = vld [vmem:[%s0 + $0xf0] sm:$0xff]
  %v42 = vld [vmem:[%s0 + $0xf8] sm:$0xff]
  %v43 = vld [vmem:[%s0 + $0x100] sm:$0xff]
  %v44 = vld [vmem:[%s0 + $0x108] sm:$0xff]
  %v45 = vld [vmem:[%s0 + $0x110] sm:$0xff]
  %v46 = vld [vmem:[%s0 + $0x118] sm:$0xff]
  %v47 = vld [vmem:[%s0 + $0x120] sm:$0xff]
  %v48 = vld [vmem:[%s0 + $0x128] sm:$0xff]
  %v49 = vld [vmem:[%s0 + $0x130] sm:$0xff]
  %v50 = vld [vmem:[%s0 + $0x138] sm:$0xff]
  %v51 = vld [vmem:[%s0 + $0x140] sm:$0xff]
  %v52 = vld [vmem:[%s0 + $0x148] sm:$0xff]
  %v53 = vld [vmem:[%s0 + $0x150] sm:$0xff]
  %v54 = vld [vmem:[%s0 + $0x158] sm:$0xff]
  %v55 = vld [vmem:[%s0 + $0x160] sm:$0xff]
  %v56 = vld [vmem:[%s0 + $0x168] sm:$0xff]
  %v57 = vld [vmem:[%s0 + $0x170] sm:$0xff]
  %v58 = vld [vmem:[%s0 + $0x178] sm:$0xff]
  %v59 = vld [vmem:[%s0 + $0x180] sm:$0xff]
  %v60 = vld [vmem:[%s0 + $0x188] sm:$0xff]
  %v61 = vld [vmem:[%s0 + $0x190] sm:$0xff]
  %v62 = vld [vmem:[%s0 + $0x198] sm:$0xff]
  %v63 = vld [vmem:[%s0 + $0x1a0] sm:$0xff]
  %v64 = vld [vmem:[%s0 + $0x1a8] sm:$0xff]
  %v65 = vld [vmem:[%s0 + $0x1b0] sm:$0xff]
  %v66 = vld [vmem:[%s0 + $0x1b8] sm:$0xff]
  %v67 = vld [vmem:[%s0 + $0x1c0] sm:$0xff]
  %v68 = vld [vmem:[%s0 + $0x1c8] sm:$0xff]
  %v69 = vld [vmem:[%s0 + $0x1d0] sm:$0xff]
  %v70 = vld [vmem:[%s0 + $0x1d8] sm:$0xff]
  %v71 = vld [vmem:[%s0 + $0x1e0] sm:$0xff]
  %v72 = vld [vmem:[%s0 + $0x1e8] sm:$0xff]
  %v73 = vld [vmem:[%s0 + $0x1f0] sm:$0xff]
  %v74 = vld [vmem:[%s0 + $0x1f8] sm:$0xff]
  %v75 = vld [vmem:[%s0 + $0x200] sm:$0xff]
  %v76 = vld [vmem:[%s0 + $0x208] sm:$0xff]
  %v77 = vld [vmem:[%s0 + $0x210] sm:$0xff]
  %v78 = vld [vmem:[%s0 + $0x218] sm:$0xff]
  %v79 = vld [vmem:[%s0 + $0x220] sm:$0xff]
  %v80 = vld [vmem:[%s0 + $0x228] sm:$0xff]
  %v81 = vld [vmem:[%s0 + $0x230] sm:$0xff]
  %v82 = vld [vmem:[%s0 + $0x238] sm:$0xff]
  %v83 = vld [vmem:[%s0 + $0x240] sm:$0xff]
  %v84 = vld [vmem:[%s0 + $0x248] sm:$0xff]
  %v85 = vld [vmem:[%s0 + $0x250] sm:$0xff]
  %v86 = vld [vmem:[%s0 + $0x258] sm:$0xff]
  %v87 = vld [vmem:[%s0 + $0x260] sm:$0xff]
  %v88 = vld [vmem:[%s0 + $0x268] sm:$0xff]
  %v89 = vld [vmem:[%s0 + $0x270] sm:$0xff]
  %v90 = vld [vmem:[%s0 + $0x278] sm:$0xff]
  %v91 = vld [vmem:[%s0 + $0x280] sm:$0xff]
  %v92 = vld [vmem:[%s0 + $0x288] sm:$0xff]
  %v93 = vld [vmem:[%s0 + $0x290] sm:$0xff]
  %v94 = vld [vmem:[%s0 + $0x298] sm:$0xff]
  %v95 = vld [vmem:[%s0 + $0x2a0] sm:$0xff]
  %v96 = vld [vmem:[%s0 + $0x2a8] sm:$0xff]
  %v97 = vld [vmem:[%s0 + $0x2b0] sm:$0xff]
  %v98 = vld [vmem:[%s0 + $0x2b8] sm:$0xff]
  %v99 = vld [vmem:[%s0 + $0x2c0] sm:$0xff]
  %v100 = vld [vmem:[%s0 + $0x2c8] sm:$0xff]
  %v101 = vld [vmem:[%s0 + $0x2d0] sm:$0xff]
  %v102 = vld [vmem:[%s0 + $0x2d8] sm:$0xff]
  %v103 = vld [vmem:[%s0 + $0x2e0] sm:$0xff]
  %v104 = vld [vmem:[%s0 + $0x2e8] sm:$0xff]
  %v105 = vld [vmem:[%s0 + $0x2f0] sm:$0xff]
  %v106 = vld [vmem:[%s0 + $0x2f8] sm:$0xff]
  %v107 = vld [vmem:[%s0 + $0x300] sm:$0xff]
  %v108 = vld [vmem:[%s0 + $0x308] sm:$0xff]
  %v109 = vld [vmem:[%s0 + $0x310] sm:$0xff]
  %v110 = vld [vmem:[%s0 + $0x318] sm:$0xff]
  %v111 = vld [vmem:[%s0 + $0x320] sm:$0xff]
  %v112 = vld [vmem:[%s0 + $0x328] sm:$0xff]
  %v113 = vld [vmem:[%s0 + $0x330] sm:$0xff]
  %v114 = vld [vmem:[%s0 + $0x338] sm:$0xff]
  %v115 = vld [vmem:[%s0 + $0x340] sm:$0xff]
  %v116 = vld [vmem:[%s0 + $0x348] sm:$0xff]
  %v117 = vld [vmem:[%s0 + $0x350] sm:$0xff]
  %v118 = vld [vmem:[%s0 + $0x358] sm:$0xff]
  %v119 = vld [vmem:[%s0 + $0x360] sm:$0xff]
  %v120 = vld [vmem:[%s0 + $0x368] sm:$0xff]
  %v121 = vld [vmem:[%s0 + $0x370] sm:$0xff]
  %v122 = vld [vmem:[%s0 + $0x378] sm:$0xff]
  %v123 = vld [vmem:[%s0 + $0x380] sm:$0xff]
  %v124 = vld [vmem:[%s0 + $0x388] sm:$0xff]
  %v125 = vld [vmem:[%s0 + $0x390] sm:$0xff]
  %v126 = vld [vmem:[%s0 + $0x398] sm:$0xff]
  %v127 = vld [vmem:[%s0 + $0x3a0] sm:$0xff]
  %v128 = vld [vmem:[%s0 + $0x3a8] sm:$0xff]
  %v129 = vld [vmem:[%s0 + $0x3b0] sm:$0xff]
  %v130 = vld [vmem:[%s0 + $0x3b8] sm:$0xff]
  %v131 = vld [vmem:[%s0 + $0x3c0] sm:$0xff]
  %v132 = vld [vmem:[%s0 + $0x3c8] sm:$0xff]
  %v133 = vld [vmem:[%s0 + $0x3d0] sm:$0xff]
  %v134 = vld [vmem:[%s0 + $0x3d8] sm:$0xff]
  %v135 = vld [vmem:[%s0 + $0x3e0] sm:$0xff]
  %v136 = vld [vmem:[%s0 + $0x3e8] sm:$0xff]
  %v137 = vld [vmem:[%s0 + $0x3f0] sm:$0xff]
  %v138 = vld [vmem:[%s0 + $0x3f8] sm:$0xff]
  %v139 = vld [vmem:[%s0 + $0x400] sm:$0xff]
  %v140 = vld [vmem:[%s0 + $0x408] sm:$0xff]
  %v141 = vld [vmem:[%s0 + $0x410] sm:$0xff]
  %v142 = vld [vmem:[%s0 + $0x418] sm:$0xff]
  %v143 = vld [vmem:[%s0 + $0x420] sm:$0xff]
  %v144 = vld [vmem:[%s0 + $0x428] sm:$0xff]
  %v145 = vld [vmem:[%s0 + $0x430] sm:$0xff]
  %v146 = vld [vmem:[%s0 + $0x438] sm:$0xff]
  %v147 = vld [vmem:[%s0 + $0x440] sm:$0xff]
  %v148 = vld [vmem:[%s0 + $0x448] sm:$0xff]
  %v149 = vld [vmem:[%s0 + $0x450] sm:$0xff]
  %v150 = vld [vmem:[%s0 + $0x458] sm:$0xff]
  %v151 = vld [vmem:[%s0 + $0x460] sm:$0xff]
  %v152 = vld [vmem:[%s0 + $0x468] sm:$0xff]
  %v153 = vld [vmem:[%s0 + $0x470] sm:$0xff]
  %v154 = vld [vmem:[%s0 + $0x478] sm:$0xff]
  %v155 = vld [vmem:[%s0 + $0x480] sm:$0xff]
  %v156 = vld [vmem:[%s0 + $0x488] sm:$0xff]
  %v157 = vld [vmem:[%s0 + $0x490] sm:$0xff]
  %v158 = vld [vmem:[%s0 + $0x498] sm:$0xff]
  %v159 = vld [vmem:[%s0 + $0x4a0] sm:$0xff]
  %v160 = vld [vmem:[%s0 + $0x4a8] sm:$0xff]
  %v161 = vld [vmem:[%s0 + $0x4b0] sm:$0xff]
  %v162 = vld [vmem:[%s0 + $0x4b8] sm:$0xff]
  %v163 = vld [vmem:[%s0 + $0x4c0] sm:$0xff]
  %v164 = vld [vmem:[%s0 + $0x4c8] sm:$0xff]
  %v165 = vld [vmem:[%s0 + $0x4d0] sm:$0xff]
  %v166 = vld [vmem:[%s0 + $0x4d8] sm:$0xff]
  %v167 = vld [vmem:[%s0 + $0x4e0] sm:$0xff]
  %v168 = vld [vmem:[%s0 + $0x4e8] sm:$0xff]
  %v169 = vld [vmem:[%s0 + $0x4f0] sm:$0xff]
  %v170 = vld [vmem:[%s0 + $0x4f8] sm:$0xff]
  %v171 = vld [vmem:[%s0 + $0x500] sm:$0xff]
  %v172 = vld [vmem:[%s0 + $0x508] sm:$0xff]
  %v173 = vld [vmem:[%s0 + $0x510] sm:$0xff]
  %v174 = vld [vmem:[%s0 + $0x518] sm:$0xff]
  %v175 = vld [vmem:[%s0 + $0x520] sm:$0xff]
  %v176 = vld [vmem:[%s0 + $0x528] sm:$0xff]
  %v177 = vld [vmem:[%s0 + $0x530] sm:$0xff]
  %v178 = vld [vmem:[%s0 + $0x538] sm:$0xff]
  %v179 = vld [vmem:[%s0 + $0x540] sm:$0xff]
  %v180 = vld [vmem:[%s0 + $0x548] sm:$0xff]
  %v181 = vld [vmem:[%s0 + $0x550] sm:$0xff]
  %v182 = vld [vmem:[%s0 + $0x558] sm:$0xff]
  %v183 = vld [vmem:[%s0 + $0x560] sm:$0xff]
  %v184 = vld [vmem:[%s0 + $0x568] sm:$0xff]
  %v185 = vld [vmem:[%s0 + $0x570] sm:$0xff]
  %v186 = vld [vmem:[%s0 + $0x578] sm:$0xff]
  %v187 = vld [vmem:[%s0 + $0x580] sm:$0xff]
  %v188 = vld [vmem:[%s0 + $0x588] sm:$0xff]
  %v189 = vld [vmem:[%s0 + $0x590] sm:$0xff]
  %v190 = vld [vmem:[%s0 + $0x598] sm:$0xff]
  %v191 = vld [vmem:[%s0 + $0x5a0] sm:$0xff]
  %v192 = vld [vmem:[%s0 + $0x5a8] sm:$0xff]
  %v193 = vld [vmem:[%s0 + $0x5b0] sm:$0xff]
  %v194 = vld [vmem:[%s0 + $0x5b8] sm:$0xff]
  %v195 = vld [vmem:[%s0 + $0x5c0] sm:$0xff]
  %v196 = vld [vmem:[%s0 + $0x5c8] sm:$0xff]
  %v197 = vld [vmem:[%s0 + $0x5d0] sm:$0xff]
  %v198 = vld [vmem:[%s0 + $0x5d8] sm:$0xff]
  %v199 = vld [vmem:[%s0 + $0x5e0] sm:$0xff]
  %v200 = vld [vmem:[%s0 + $0x5e8] sm:$0xff]
  %v201 = vld [vmem:[%s0 + $0x5f0] sm:$0xff]
  %v202 = vld [vmem:[%s0 + $0x5f8] sm:$0xff]
  %v203 = vld [vmem:[%s0 + $0x600] sm:$0xff]
  %v204 = vld [vmem:[%s0 + $0x608] sm:$0xff]
  %v205 = vld [vmem:[%s0 + $0x610] sm:$0xff]
  %v206 = vld [vmem:[%s0 + $0x618] sm:$0xff]
  %v207 = vld [vmem:[%s0 + $0x620] sm:$0xff]
  %v208 = vld [vmem:[%s0 + $0x628] sm:$0xff]
  %v209 = vld [vmem:[%s0 + $0x630] sm:$0xff]
  %v210 = vld [vmem:[%s0 + $0x638] sm:$0xff]
  %v211 = vld [vmem:[%s0 + $0x640] sm:$0xff]
  %v212 = vld [vmem:[%s0 + $0x648] sm:$0xff]
  %v213 = vld [vmem:[%s0 + $0x650] sm:$0xff]
  %v214 = vld [vmem:[%s0 + $0x658] sm:$0xff]
  %v215 = vld [vmem:[%s0 + $0x660] sm:$0xff]
  %v216 = vld [vmem:[%s0 + $0x668] sm:$0xff]
  %v217 = vld [vmem:[%s0 + $0x670] sm:$0xff]
  %v218 = vld [vmem:[%s0 + $0x678] sm:$0xff]
  %v219 = vld [vmem:[%s0 + $0x680] sm:$0xff]
  %v220 = vld [vmem:[%s0 + $0x688] sm:$0xff]
  %v221 = vld [vmem:[%s0 + $0x690] sm:$0xff]
  %v222 = vld [vmem:[%s0 + $0x698] sm:$0xff]
  %v223 = vld [vmem:[%s0 + $0x6a0] sm:$0xff]
  %v224 = vld [vmem:[%s0 + $0x6a8] sm:$0xff]
  %v225 = vld [vmem:[%s0 + $0x6b0] sm:$0xff]
  %v226 = vld [vmem:[%s0 + $0x6b8] sm:$0xff]
  %v227 = vld [vmem:[%s0 + $0x6c0] sm:$0xff]
  %v228 = vld [vmem:[%s0 + $0x6c8] sm:$0xff]
  %v229 = vld [vmem:[%s0 + $0x6d0] sm:$0xff]
  %v230 = vld [vmem:[%s0 + $0x6d8] sm:$0xff]
  %v231 = vld [vmem:[%s0 + $0x6e0] sm:$0xff]
  %v232 = vld [vmem:[%s0 + $0x6e8] sm:$0xff]
  %v233 = vld [vmem:[%s0 + $0x6f0] sm:$0xff]
  %v234 = vld [vmem:[%s0 + $0x6f8] sm:$0xff]
  %v235 = vld [vmem:[%s0 + $0x700] sm:$0xff]
  %v236 = vld [vmem:[%s0 + $0x708] sm:$0xff]
  %v237 = vld [vmem:[%s0 + $0x710] sm:$0xff]
  %v238 = vld [vmem:[%s0 + $0x718] sm:$0xff]
  %v239 = vld [vmem:[%s0 + $0x720] sm:$0xff]
  %v240 = vld [vmem:[%s0 + $0x728] sm:$0xff]
  %v241 = vld [vmem:[%s0 + $0x730] sm:$0xff]
  %v242 = vld [vmem:[%s0 + $0x738] sm:$0xff]
  %v243 = vld [vmem:[%s0 + $0x740] sm:$0xff]
  %v244 = vld [vmem:[%s0 + $0x748] sm:$0xff]
  %v245 = vld [vmem:[%s0 + $0x750] sm:$0xff]
  %v246 = vld [vmem:[%s0 + $0x758] sm:$0xff]
  %v247 = vld [vmem:[%s0 + $0x760] sm:$0xff]
  %v248 = vld [vmem:[%s0 + $0x768] sm:$0xff]
  %v249 = vld [vmem:[%s0 + $0x770] sm:$0xff]
  %v250 = vld [vmem:[%s0 + $0x778] sm:$0xff]
  %v251 = vld [vmem:[%s0 + $0x780] sm:$0xff]
  %v252 = vld [vmem:[%s0 + $0x788] sm:$0xff]
  %v253 = vld [vmem:[%s0 + $0x790] sm:$0xff]
  %v254 = vld [vmem:[%s0 + $0x798] sm:$0xff]
  %v255 = vld [vmem:[%s0 + $0x7a0] sm:$0xff]
  %v256 = vld [vmem:[%s0 + $0x7a8] sm:$0xff]
  %v257 = vld [vmem:[%s0 + $0x7b0] sm:$0xff]
  %v258 = vld [vmem:[%s0 + $0x7b8] sm:$0xff]
  %v259 = vld [vmem:[%s0 + $0x7c0] sm:$0xff]
  %v260 = vld [vmem:[%s0 + $0x7c8] sm:$0xff]
  %v261 = vld [vmem:[%s0 + $0x7d0] sm:$0xff]
  %v262 = vld [vmem:[%s0 + $0x7d8] sm:$0xff]
  %v263 = vld [vmem:[%s0 + $0x7e0] sm:$0xff]
  %v264 = vld [vmem:[%s0 + $0x7e8] sm:$0xff]
  %v265 = vld [vmem:[%s0 + $0x7f0] sm:$0xff]
  %v266 = vld [vmem:[%s0 + $0x7f8] sm:$0xff]
  %v267 = vld [vmem:[%s0 + $0x800] sm:$0xff]
  %v268 = vld [vmem:[%s0 + $0x808] sm:$0xff]
  %v269 = vld [vmem:[%s0 + $0x810] sm:$0xff]
  %v270 = vld [vmem:[%s0 + $0x818] sm:$0xff]
  %v271 = vld [vmem:[%s0 + $0x820] sm:$0xff]
  %v272 = vld [vmem:[%s0 + $0x828] sm:$0xff]
  %v273 = vld [vmem:[%s0 + $0x830] sm:$0xff]
  %v274 = vld [vmem:[%s0 + $0x838] sm:$0xff]
  %v275 = vld [vmem:[%s0 + $0x840] sm:$0xff]
  %v276 = vld [vmem:[%s0 + $0x848] sm:$0xff]
  %v277 = vld [vmem:[%s0 + $0x850] sm:$0xff]
  %v278 = vld [vmem:[%s0 + $0x858] sm:$0xff]
  %v279 = vld [vmem:[%s0 + $0x860] sm:$0xff]
  %v280 = vld [vmem:[%s0 + $0x868] sm:$0xff]
  %v281 = vld [vmem:[%s0 + $0x870] sm:$0xff]
  %v282 = vld [vmem:[%s0 + $0x878] sm:$0xff]
  %v283 = vld [vmem:[%s0 + $0x880] sm:$0xff]
  %v284 = vld [vmem:[%s0 + $0x888] sm:$0xff]
  %v285 = vld [vmem:[%s0 + $0x890] sm:$0xff]
  %v286 = vld [vmem:[%s0 + $0x898] sm:$0xff]
  %v287 = vld [vmem:[%s1] sm:$0xff]
  %v288 = vld [vmem:[%s1 + $0x8] sm:$0xff]
  %v289 = vld [vmem:[%s1 + $0x10] sm:$0xff]
  %v290 = vld [vmem:[%s1 + $0x18] sm:$0xff]
  %v291 = vld [vmem:[%s1 + $0x20] sm:$0xff]
  %v292 = vld [vmem:[%s1 + $0x28] sm:$0xff]
  %v293 = vld [vmem:[%s1 + $0x30] sm:$0xff]
  %v294 = vld [vmem:[%s1 + $0x38] sm:$0xff]
  %v295 = vld [vmem:[%s1 + $0x40] sm:$0xff]
  %v296 = vld [vmem:[%s1 + $0x48] sm:$0xff]
  %v297 = vld [vmem:[%s1 + $0x50] sm:$0xff]
  %v298 = vld [vmem:[%s1 + $0x58] sm:$0xff]
  %v299 = vld [vmem:[%s1 + $0x60] sm:$0xff]
  %v300 = vld [vmem:[%s1 + $0x68] sm:$0xff]
  %v301 = vld [vmem:[%s1 + $0x70] sm:$0xff]
  %v302 = vld [vmem:[%s1 + $0x78] sm:$0xff]
  %v303 = vld [vmem:[%s1 + $0x80] sm:$0xff]
  %v304 = vld [vmem:[%s1 + $0x88] sm:$0xff]
  %v305 = vld [vmem:[%s1 + $0x90] sm:$0xff]
  %v306 = vld [vmem:[%s1 + $0x98] sm:$0xff]
  %v307 = vld [vmem:[%s1 + $0xa0] sm:$0xff]
  %v308 = vld [vmem:[%s1 + $0xa8] sm:$0xff]
  %v309 = vld [vmem:[%s1 + $0xb0] sm:$0xff]
  %vm310 = vcmask 457728
  %v312 = vsel %vm310, %v12, 0
  %v315 = vsel %vm310, %v14, 0
  %v318 = vsel %vm310, %v16, 0
  %v321 = vsel %vm310, %v18, 0
  %v324 = vsel %vm310, %v20, 0
  %v327 = vsel %vm310, %v22, 0
  %v330 = vsel %vm310, %v24, 0
  %v333 = vsel %vm310, %v26, 0
  %v336 = vsel %vm310, %v28, 0
  %v339 = vsel %vm310, %v30, 0
  %v342 = vsel %vm310, %v32, 0
  %v345 = vsel %vm310, %v34, 0
  %v348 = vsel %vm310, %v36, 0
  %v351 = vsel %vm310, %v38, 0
  %v354 = vsel %vm310, %v40, 0
  %v357 = vsel %vm310, %v42, 0
  %v360 = vsel %vm310, %v44, 0
  %v363 = vsel %vm310, %v46, 0
  %v366 = vsel %vm310, %v48, 0
  %v369 = vsel %vm310, %v50, 0
  %v372 = vsel %vm310, %v52, 0
  %v375 = vsel %vm310, %v54, 0
  %v378 = vsel %vm310, %v56, 0
  %v381 = vsel %vm310, %v58, 0
  %v384 = vsel %vm310, %v60, 0
  %v387 = vsel %vm310, %v62, 0
  %v390 = vsel %vm310, %v64, 0
  %v393 = vsel %vm310, %v66, 0
  %v396 = vsel %vm310, %v68, 0
  %v399 = vsel %vm310, %v70, 0
  %v402 = vsel %vm310, %v72, 0
  %v405 = vsel %vm310, %v74, 0
  %v408 = vsel %vm310, %v76, 0
  %v411 = vsel %vm310, %v78, 0
  %v414 = vsel %vm310, %v80, 0
  %v417 = vsel %vm310, %v82, 0
  %v420 = vsel %vm310, %v84, 0
  %v423 = vsel %vm310, %v86, 0
  %v426 = vsel %vm310, %v88, 0
  %v429 = vsel %vm310, %v90, 0
  %v432 = vsel %vm310, %v92, 0
  %v435 = vsel %vm310, %v94, 0
  %v438 = vsel %vm310, %v96, 0
  %v441 = vsel %vm310, %v98, 0
  %v444 = vsel %vm310, %v100, 0
  %v447 = vsel %vm310, %v102, 0
  %v450 = vsel %vm310, %v104, 0
  %v453 = vsel %vm310, %v106, 0
  %v456 = vsel %vm310, %v108, 0
  %v459 = vsel %vm310, %v110, 0
  %v462 = vsel %vm310, %v112, 0
  %v465 = vsel %vm310, %v114, 0
  %v468 = vsel %vm310, %v116, 0
  %v471 = vsel %vm310, %v118, 0
  %v474 = vsel %vm310, %v120, 0
  %v477 = vsel %vm310, %v122, 0
  %v480 = vsel %vm310, %v124, 0
  %v483 = vsel %vm310, %v126, 0
  %v486 = vsel %vm310, %v128, 0
  %v489 = vsel %vm310, %v130, 0
  %v492 = vsel %vm310, %v132, 0
  %v495 = vsel %vm310, %v134, 0
  %v498 = vsel %vm310, %v136, 0
  %v501 = vsel %vm310, %v138, 0
  %v504 = vsel %vm310, %v140, 0
  %v507 = vsel %vm310, %v142, 0
  %v510 = vsel %vm310, %v144, 0
  %v513 = vsel %vm310, %v146, 0
  %v516 = vsel %vm310, %v148, 0
  %v519 = vsel %vm310, %v150, 0
  %v522 = vsel %vm310, %v152, 0
  %v525 = vsel %vm310, %v154, 0
  %v528 = vsel %vm310, %v156, 0
  %v531 = vsel %vm310, %v158, 0
  %v534 = vsel %vm310, %v160, 0
  %v537 = vsel %vm310, %v162, 0
  %v540 = vsel %vm310, %v164, 0
  %v543 = vsel %vm310, %v166, 0
  %v546 = vsel %vm310, %v168, 0
  %v549 = vsel %vm310, %v170, 0
  %v552 = vsel %vm310, %v172, 0
  %v555 = vsel %vm310, %v174, 0
  %v558 = vsel %vm310, %v176, 0
  %v561 = vsel %vm310, %v178, 0
  %v564 = vsel %vm310, %v180, 0
  %v567 = vsel %vm310, %v182, 0
  %v570 = vsel %vm310, %v184, 0
  %v573 = vsel %vm310, %v186, 0
  %v576 = vsel %vm310, %v188, 0
  %v579 = vsel %vm310, %v190, 0
  %v582 = vsel %vm310, %v192, 0
  %v585 = vsel %vm310, %v194, 0
  %v588 = vsel %vm310, %v196, 0
  %v591 = vsel %vm310, %v198, 0
  %v594 = vsel %vm310, %v200, 0
  %v597 = vsel %vm310, %v202, 0
  %v600 = vsel %vm310, %v204, 0
  %v603 = vsel %vm310, %v206, 0
  %v606 = vsel %vm310, %v208, 0
  %v609 = vsel %vm310, %v210, 0
  %v612 = vsel %vm310, %v212, 0
  %v615 = vsel %vm310, %v214, 0
  %v618 = vsel %vm310, %v216, 0
  %v621 = vsel %vm310, %v218, 0
  %v624 = vsel %vm310, %v220, 0
  %v627 = vsel %vm310, %v222, 0
  %v630 = vsel %vm310, %v224, 0
  %v633 = vsel %vm310, %v226, 0
  %v636 = vsel %vm310, %v228, 0
  %v639 = vsel %vm310, %v230, 0
  %v642 = vsel %vm310, %v232, 0
  %v645 = vsel %vm310, %v234, 0
  %v648 = vsel %vm310, %v236, 0
  %v651 = vsel %vm310, %v238, 0
  %v654 = vsel %vm310, %v240, 0
  %v657 = vsel %vm310, %v242, 0
  %v660 = vsel %vm310, %v244, 0
  %v663 = vsel %vm310, %v246, 0
  %v666 = vsel %vm310, %v248, 0
  %v669 = vsel %vm310, %v250, 0
  %v672 = vsel %vm310, %v252, 0
  %v675 = vsel %vm310, %v254, 0
  %v678 = vsel %vm310, %v256, 0
  %v681 = vsel %vm310, %v258, 0
  %v684 = vsel %vm310, %v260, 0
  %v687 = vsel %vm310, %v262, 0
  %v690 = vsel %vm310, %v264, 0
  %v693 = vsel %vm310, %v266, 0
  %v696 = vsel %vm310, %v268, 0
  %v699 = vsel %vm310, %v270, 0
  %v702 = vsel %vm310, %v272, 0
  %v705 = vsel %vm310, %v274, 0
  %v708 = vsel %vm310, %v276, 0
  %v711 = vsel %vm310, %v278, 0
  %v714 = vsel %vm310, %v280, 0
  %v717 = vsel %vm310, %v282, 0
  %v720 = vsel %vm310, %v284, 0
  %v723 = vsel %vm310, %v286, 0
  %725 = vmatprep.subr.mxu0 0.0
  %726 = vmatpush1.msra.mxu0 %v287
  %727 = vmatprep.subr.mxu0 0.0
  %728 = vmatpush1.msra.mxu0 %v288
  %729 = vmatprep.subr.mxu0 0.0
  %730 = vmatpush1.msra.mxu0 %v289
  %731 = vmatprep.subr.mxu0 0.0
  %732 = vmatpush1.msra.mxu0 %v290
  %733 = vmatprep.subr.mxu0 0.0
  %734 = vmatpush1.msra.mxu0 %v291
  %735 = vmatprep.subr.mxu0 0.0
  %736 = vmatpush1.msra.mxu0 %v292
  %737 = vmatprep.subr.mxu0 0.0
  %738 = vmatpush1.msra.mxu0 %v293
  %739 = vmatprep.subr.mxu0 0.0
  %740 = vmatpush1.msra.mxu0 %v294
  %741 = vmatprep.subr.mxu0 0.0
  %742 = vmatpush1.msra.mxu0 %v295
  %743 = vmatprep.subr.mxu0 0.0
  %744 = vmatpush1.msra.mxu0 %v296
  %745 = vmatprep.subr.mxu0 0.0
  %746 = vmatpush1.msra.mxu0 %v297
  %747 = vmatprep.subr.mxu0 0.0
  %748 = vmatpush1.msra.mxu0 %v298
  %749 = vmatprep.subr.mxu0 0.0
  %750 = vmatpush1.msra.mxu0 %v299
  %751 = vmatprep.subr.mxu0 0.0
  %752 = vmatpush1.msra.mxu0 %v300
  %753 = vmatprep.subr.mxu0 0.0
  %754 = vmatpush1.msra.mxu0 %v301
  %755 = vmatprep.subr.mxu0 0.0
  %756 = vmatpush1.msra.mxu0 %v302
  %757 = vmatprep.subr.mxu0 0.0
  %758 = vmatpush1.msra.mxu0 %v303
  %759 = vmatprep.subr.mxu0 0.0
  %760 = vmatpush1.msra.mxu0 %v304
  %761 = vmatprep.subr.mxu0 0.0
  %762 = vmatpush1.msra.mxu0 %v305
  %763 = vmatprep.subr.mxu0 0.0
  %764 = vmatpush1.msra.mxu0 %v306
  %765 = vmatprep.subr.mxu0 0.0
  %766 = vmatpush1.msra.mxu0 %v307
  %767 = vmatprep.subr.mxu0 0.0
  %768 = vmatpush1.msra.mxu0 %v308
  %769 = vmatprep.subr.mxu0 0.0
  %770 = vmatpush1.msra.mxu0 %v309
  %771 = vmatprep.subr.mxu0 0.0
  %772 = vmatpush1.msra.mxu0 0.0
  %773 = vmatprep.subr.mxu0 0.0
  %774 = vmatpush1.msra.mxu0 0.0
  %775 = vmatprep.subr.mxu0 0.0
  %776 = vmatpush1.msra.mxu0 0.0
  %777 = vmatprep.subr.mxu0 0.0
  %778 = vmatpush1.msra.mxu0 0.0
  %779 = vmatprep.subr.mxu0 0.0
  %780 = vmatpush1.msra.mxu0 0.0
  %781 = vmatprep.subr.mxu0 0.0
  %782 = vmatpush1.msra.mxu0 0.0
  %783 = vmatprep.subr.mxu0 0.0
  %784 = vmatpush1.msra.mxu0 0.0
  %785 = vmatprep.subr.mxu0 0.0
  %786 = vmatpush1.msra.mxu0 0.0
  %787 = vmatprep.subr.mxu0 0.0
  %788 = vmatpush1.msra.mxu0 0.0
  %789 = vmatprep.mubr.f32.mxu0 %v312
  %790 = vmatmul.mubr.f32.gmra.mrb[0].mxu0 %v11
  %v791 = vpop.f32.mrb[0].mxu0
  %v792 = vadd.f32 0.0, %v791
  %v793 = vpop.f32.mrb[0].mxu0
  %794 = vmatprep.mubr.f32.mxu0 %v315
  %795 = vmatmul.mubr.f32.gmra.mrb[0].mxu0 %v13
  %v796 = vpop.f32.mrb[0].mxu0
  %v797 = vadd.f32 0.0, %v796
  %v798 = vpop.f32.mrb[0].mxu0
  %799 = vmatprep.mubr.f32.mxu0 %v318
  %800 = vmatmul.mubr.f32.gmra.mrb[0].mxu0 %v15
  %v801 = vpop.f32.mrb[0].mxu0
  %v802 = vadd.f32 0.0, %v801
  %v803 = vpop.f32.mrb[0].mxu0
  %804 = vmatprep.mubr.f32.mxu0 %v321
  %805 = vmatmul.mubr.f32.gmra.mrb[0].mxu0 %v17
  %v806 = vpop.f32.mrb[0].mxu0
  %v807 = vadd.f32 0.0, %v806
  %v808 = vpop.f32.mrb[0].mxu0
  %809 = vmatprep.mubr.f32.mxu0 %v324
  %810 = vmatmul.mubr.f32.gmra.mrb[0].mxu0 %v19
  %v811 = vpop.f32.mrb[0].mxu0
  %v812 = vadd.f32 0.0, %v811
  %v813 = vpop.f32.mrb[0].mxu0
  %814 = vmatprep.mubr.f32.mxu0 %v327
  %815 = vmatmul.mubr.f32.gmra.mrb[0].mxu0 %v21
  %v816 = vpop.f32.mrb[0].mxu0
  %v817 = vadd.f32 0.0, %v816
  %v818 = vpop.f32.mrb[0].mxu0
  %819 = vmatprep.mubr.f32.mxu0 %v330
  %820 = vmatmul.mubr.f32.gmra.mrb[0].mxu0 %v23
  %v821 = vpop.f32.mrb[0].mxu0
  %v822 = vadd.f32 0.0, %v821
  %v823 = vpop.f32.mrb[0].mxu0
  %824 = vmatprep.mubr.f32.mxu0 %v333
  %825 = vmatmul.mubr.f32.gmra.mrb[0].mxu0 %v25
  %v826 = vpop.f32.mrb[0].mxu0
  %v827 = vadd.f32 0.0, %v826
  %v828 = vpop.f32.mrb[0].mxu0
  %829 = vmatprep.mubr.f32.mxu0 %v336
  %830 = vmatmul.mubr.f32.gmra.mrb[0].mxu0 %v27
  %v831 = vpop.f32.mrb[0].mxu0
  %v832 = vadd.f32 0.0, %v831
  %v833 = vpop.f32.mrb[0].mxu0
  %834 = vmatprep.mubr.f32.mxu0 %v339
  %835 = vmatmul.mubr.f32.gmra.mrb[0].mxu0 %v29
  %v836 = vpop.f32.mrb[0].mxu0
  %v837 = vadd.f32 0.0, %v836
  %v838 = vpop.f32.mrb[0].mxu0
  %839 = vmatprep.mubr.f32.mxu0 %v342
  %840 = vmatmul.mubr.f32.gmra.mrb[0].mxu0 %v31
  %v841 = vpop.f32.mrb[0].mxu0
  %v842 = vadd.f32 0.0, %v841
  %v843 = vpop.f32.mrb[0].mxu0
  %844 = vmatprep.mubr.f32.mxu0 %v345
  %845 = vmatmul.mubr.f32.gmra.mrb[0].mxu0 %v33
  %v846 = vpop.f32.mrb[0].mxu0
  %v847 = vadd.f32 0.0, %v846
  %v848 = vpop.f32.mrb[0].mxu0
  %849 = vmatprep.mubr.f32.mxu0 %v348
  %850 = vmatmul.mubr.f32.gmra.mrb[0].mxu0 %v35
  %v851 = vpop.f32.mrb[0].mxu0
  %v852 = vadd.f32 0.0, %v851
  %v853 = vpop.f32.mrb[0].mxu0
  %854 = vmatprep.mubr.f32.mxu0 %v351
  %855 = vmatmul.mubr.f32.gmra.mrb[0].mxu0 %v37
  %v856 = vpop.f32.mrb[0].mxu0
  %v857 = vadd.f32 0.0, %v856
  %v858 = vpop.f32.mrb[0].mxu0
  %859 = vmatprep.mubr.f32.mxu0 %v354
  %860 = vmatmul.mubr.f32.gmra.mrb[0].mxu0 %v39
  %v861 = vpop.f32.mrb[0].mxu0
  %v862 = vadd.f32 0.0, %v861
  %v863 = vpop.f32.mrb[0].mxu0
  %864 = vmatprep.mubr.f32.mxu0 %v357
  %865 = vmatmul.mubr.f32.gmra.mrb[0].mxu0 %v41
  %v866 = vpop.f32.mrb[0].mxu0
  %v867 = vadd.f32 0.0, %v866
  %v868 = vpop.f32.mrb[0].mxu0
  %869 = vmatprep.mubr.f32.mxu0 %v360
  %870 = vmatmul.mubr.f32.gmra.mrb[0].mxu0 %v43
  %v871 = vpop.f32.mrb[0].mxu0
  %v872 = vadd.f32 0.0, %v871
  %v873 = vpop.f32.mrb[0].mxu0
  %874 = vmatprep.mubr.f32.mxu0 %v363
  %875 = vmatmul.mubr.f32.gmra.mrb[0].mxu0 %v45
  %v876 = vpop.f32.mrb[0].mxu0
  %v877 = vadd.f32 0.0, %v876
  %v878 = vpop.f32.mrb[0].mxu0
  %879 = vmatprep.mubr.f32.mxu0 %v366
  %880 = vmatmul.mubr.f32.gmra.mrb[0].mxu0 %v47
  %v881 = vpop.f32.mrb[0].mxu0
  %v882 = vadd.f32 0.0, %v881
  %v883 = vpop.f32.mrb[0].mxu0
  %884 = vmatprep.mubr.f32.mxu0 %v369
  %885 = vmatmul.mubr.f32.gmra.mrb[0].mxu0 %v49
  %v886 = vpop.f32.mrb[0].mxu0
  %v887 = vadd.f32 0.0, %v886
  %v888 = vpop.f32.mrb[0].mxu0
  %889 = vmatprep.mubr.f32.mxu0 %v372
  %890 = vmatmul.mubr.f32.gmra.mrb[0].mxu0 %v51
  %v891 = vpop.f32.mrb[0].mxu0
  %v892 = vadd.f32 0.0, %v891
  %v893 = vpop.f32.mrb[0].mxu0
  %894 = vmatprep.mubr.f32.mxu0 %v375
  %895 = vmatmul.mubr.f32.gmra.mrb[0].mxu0 %v53
  %v896 = vpop.f32.mrb[0].mxu0
  %v897 = vadd.f32 0.0, %v896
  %v898 = vpop.f32.mrb[0].mxu0
  %899 = vmatprep.mubr.f32.mxu0 %v378
  %900 = vmatmul.mubr.f32.gmra.mrb[0].mxu0 %v55
  %v901 = vpop.f32.mrb[0].mxu0
  %v902 = vadd.f32 0.0, %v901
  %v903 = vpop.f32.mrb[0].mxu0
  %904 = vmatprep.mubr.f32.mxu0 %v381
  %905 = vmatmul.mubr.f32.gmra.mrb[0].mxu0 %v57
  %v906 = vpop.f32.mrb[0].mxu0
  %v907 = vadd.f32 0.0, %v906
  %v908 = vpop.f32.mrb[0].mxu0
  %909 = vmatprep.mubr.f32.mxu0 %v384
  %910 = vmatmul.mubr.f32.gmra.mrb[0].mxu0 %v59
  %v911 = vpop.f32.mrb[0].mxu0
  %v912 = vadd.f32 0.0, %v911
  %v913 = vpop.f32.mrb[0].mxu0
  %914 = vmatprep.mubr.f32.mxu0 %v387
  %915 = vmatmul.mubr.f32.gmra.mrb[0].mxu0 %v61
  %v916 = vpop.f32.mrb[0].mxu0
  %v917 = vadd.f32 0.0, %v916
  %v918 = vpop.f32.mrb[0].mxu0
  %919 = vmatprep.mubr.f32.mxu0 %v390
  %920 = vmatmul.mubr.f32.gmra.mrb[0].mxu0 %v63
  %v921 = vpop.f32.mrb[0].mxu0
  %v922 = vadd.f32 0.0, %v921
  %v923 = vpop.f32.mrb[0].mxu0
  %924 = vmatprep.mubr.f32.mxu0 %v393
  %925 = vmatmul.mubr.f32.gmra.mrb[0].mxu0 %v65
  %v926 = vpop.f32.mrb[0].mxu0
  %v927 = vadd.f32 0.0, %v926
  %v928 = vpop.f32.mrb[0].mxu0
  %929 = vmatprep.mubr.f32.mxu0 %v396
  %930 = vmatmul.mubr.f32.gmra.mrb[0].mxu0 %v67
  %v931 = vpop.f32.mrb[0].mxu0
  %v932 = vadd.f32 0.0, %v931
  %v933 = vpop.f32.mrb[0].mxu0
  %934 = vmatprep.mubr.f32.mxu0 %v399
  %935 = vmatmul.mubr.f32.gmra.mrb[0].mxu0 %v69
  %v936 = vpop.f32.mrb[0].mxu0
  %v937 = vadd.f32 0.0, %v936
  %v938 = vpop.f32.mrb[0].mxu0
  %939 = vmatprep.mubr.f32.mxu0 %v402
  %940 = vmatmul.mubr.f32.gmra.mrb[0].mxu0 %v71
  %v941 = vpop.f32.mrb[0].mxu0
  %v942 = vadd.f32 0.0, %v941
  %v943 = vpop.f32.mrb[0].mxu0
  %944 = vmatprep.mubr.f32.mxu0 %v405
  %945 = vmatmul.mubr.f32.gmra.mrb[0].mxu0 %v73
  %v946 = vpop.f32.mrb[0].mxu0
  %v947 = vadd.f32 0.0, %v946
  %v948 = vpop.f32.mrb[0].mxu0
  %949 = vmatprep.mubr.f32.mxu0 %v408
  %950 = vmatmul.mubr.f32.gmra.mrb[0].mxu0 %v75
  %v951 = vpop.f32.mrb[0].mxu0
  %v952 = vadd.f32 0.0, %v951
  %v953 = vpop.f32.mrb[0].mxu0
  %954 = vmatprep.mubr.f32.mxu0 %v411
  %955 = vmatmul.mubr.f32.gmra.mrb[0].mxu0 %v77
  %v956 = vpop.f32.mrb[0].mxu0
  %v957 = vadd.f32 0.0, %v956
  %v958 = vpop.f32.mrb[0].mxu0
  %959 = vmatprep.mubr.f32.mxu0 %v414
  %960 = vmatmul.mubr.f32.gmra.mrb[0].mxu0 %v79
  %v961 = vpop.f32.mrb[0].mxu0
  %v962 = vadd.f32 0.0, %v961
  %v963 = vpop.f32.mrb[0].mxu0
  %964 = vmatprep.mubr.f32.mxu0 %v417
  %965 = vmatmul.mubr.f32.gmra.mrb[0].mxu0 %v81
  %v966 = vpop.f32.mrb[0].mxu0
  %v967 = vadd.f32 0.0, %v966
  %v968 = vpop.f32.mrb[0].mxu0
  %969 = vmatprep.mubr.f32.mxu0 %v420
  %970 = vmatmul.mubr.f32.gmra.mrb[0].mxu0 %v83
  %v971 = vpop.f32.mrb[0].mxu0
  %v972 = vadd.f32 0.0, %v971
  %v973 = vpop.f32.mrb[0].mxu0
  %974 = vmatprep.mubr.f32.mxu0 %v423
  %975 = vmatmul.mubr.f32.gmra.mrb[0].mxu0 %v85
  %v976 = vpop.f32.mrb[0].mxu0
  %v977 = vadd.f32 0.0, %v976
  %v978 = vpop.f32.mrb[0].mxu0
  %979 = vmatprep.mubr.f32.mxu0 %v426
  %980 = vmatmul.mubr.f32.gmra.mrb[0].mxu0 %v87
  %v981 = vpop.f32.mrb[0].mxu0
  %v982 = vadd.f32 0.0, %v981
  %v983 = vpop.f32.mrb[0].mxu0
  %984 = vmatprep.mubr.f32.mxu0 %v429
  %985 = vmatmul.mubr.f32.gmra.mrb[0].mxu0 %v89
  %v986 = vpop.f32.mrb[0].mxu0
  %v987 = vadd.f32 0.0, %v986
  %v988 = vpop.f32.mrb[0].mxu0
  %989 = vmatprep.mubr.f32.mxu0 %v432
  %990 = vmatmul.mubr.f32.gmra.mrb[0].mxu0 %v91
  %v991 = vpop.f32.mrb[0].mxu0
  %v992 = vadd.f32 0.0, %v991
  %v993 = vpop.f32.mrb[0].mxu0
  %994 = vmatprep.mubr.f32.mxu0 %v435
  %995 = vmatmul.mubr.f32.gmra.mrb[0].mxu0 %v93
  %v996 = vpop.f32.mrb[0].mxu0
  %v997 = vadd.f32 0.0, %v996
  %v998 = vpop.f32.mrb[0].mxu0
  %999 = vmatprep.mubr.f32.mxu0 %v438
  %1000 = vmatmul.mubr.f32.gmra.mrb[0].mxu0 %v95
  %v1001 = vpop.f32.mrb[0].mxu0
  %v1002 = vadd.f32 0.0, %v1001
  %v1003 = vpop.f32.mrb[0].mxu0
  %1004 = vmatprep.mubr.f32.mxu0 %v441
  %1005 = vmatmul.mubr.f32.gmra.mrb[0].mxu0 %v97
  %v1006 = vpop.f32.mrb[0].mxu0
  %v1007 = vadd.f32 0.0, %v1006
  %v1008 = vpop.f32.mrb[0].mxu0
  %1009 = vmatprep.mubr.f32.mxu0 %v444
  %1010 = vmatmul.mubr.f32.gmra.mrb[0].mxu0 %v99
  %v1011 = vpop.f32.mrb[0].mxu0
  %v1012 = vadd.f32 0.0, %v1011
  %v1013 = vpop.f32.mrb[0].mxu0
  %1014 = vmatprep.mubr.f32.mxu0 %v447
  %1015 = vmatmul.mubr.f32.gmra.mrb[0].mxu0 %v101
  %v1016 = vpop.f32.mrb[0].mxu0
  %v1017 = vadd.f32 0.0, %v1016
  %v1018 = vpop.f32.mrb[0].mxu0
  %1019 = vmatprep.mubr.f32.mxu0 %v450
  %1020 = vmatmul.mubr.f32.gmra.mrb[0].mxu0 %v103
  %v1021 = vpop.f32.mrb[0].mxu0
  %v1022 = vadd.f32 0.0, %v1021
  %v1023 = vpop.f32.mrb[0].mxu0
  %1024 = vmatprep.mubr.f32.mxu0 %v453
  %1025 = vmatmul.mubr.f32.gmra.mrb[0].mxu0 %v105
  %v1026 = vpop.f32.mrb[0].mxu0
  %v1027 = vadd.f32 0.0, %v1026
  %v1028 = vpop.f32.mrb[0].mxu0
  %1029 = vmatprep.mubr.f32.mxu0 %v456
  %1030 = vmatmul.mubr.f32.gmra.mrb[0].mxu0 %v107
  %v1031 = vpop.f32.mrb[0].mxu0
  %v1032 = vadd.f32 0.0, %v1031
  %v1033 = vpop.f32.mrb[0].mxu0
  %1034 = vmatprep.mubr.f32.mxu0 %v459
  %1035 = vmatmul.mubr.f32.gmra.mrb[0].mxu0 %v109
  %v1036 = vpop.f32.mrb[0].mxu0
  %v1037 = vadd.f32 0.0, %v1036
  %v1038 = vpop.f32.mrb[0].mxu0
  %1039 = vmatprep.mubr.f32.mxu0 %v462
  %1040 = vmatmul.mubr.f32.gmra.mrb[0].mxu0 %v111
  %v1041 = vpop.f32.mrb[0].mxu0
  %v1042 = vadd.f32 0.0, %v1041
  %v1043 = vpop.f32.mrb[0].mxu0
  %1044 = vmatprep.mubr.f32.mxu0 %v465
  %1045 = vmatmul.mubr.f32.gmra.mrb[0].mxu0 %v113
  %v1046 = vpop.f32.mrb[0].mxu0
  %v1047 = vadd.f32 0.0, %v1046
  %v1048 = vpop.f32.mrb[0].mxu0
  %1049 = vmatprep.mubr.f32.mxu0 %v468
  %1050 = vmatmul.mubr.f32.gmra.mrb[0].mxu0 %v115
  %v1051 = vpop.f32.mrb[0].mxu0
  %v1052 = vadd.f32 0.0, %v1051
  %v1053 = vpop.f32.mrb[0].mxu0
  %1054 = vmatprep.mubr.f32.mxu0 %v471
  %1055 = vmatmul.mubr.f32.gmra.mrb[0].mxu0 %v117
  %v1056 = vpop.f32.mrb[0].mxu0
  %v1057 = vadd.f32 0.0, %v1056
  %v1058 = vpop.f32.mrb[0].mxu0
  %1059 = vmatprep.mubr.f32.mxu0 %v474
  %1060 = vmatmul.mubr.f32.gmra.mrb[0].mxu0 %v119
  %v1061 = vpop.f32.mrb[0].mxu0
  %v1062 = vadd.f32 0.0, %v1061
  %v1063 = vpop.f32.mrb[0].mxu0
  %1064 = vmatprep.mubr.f32.mxu0 %v477
  %1065 = vmatmul.mubr.f32.gmra.mrb[0].mxu0 %v121
  %v1066 = vpop.f32.mrb[0].mxu0
  %v1067 = vadd.f32 0.0, %v1066
  %v1068 = vpop.f32.mrb[0].mxu0
  %1069 = vmatprep.mubr.f32.mxu0 %v480
  %1070 = vmatmul.mubr.f32.gmra.mrb[0].mxu0 %v123
  %v1071 = vpop.f32.mrb[0].mxu0
  %v1072 = vadd.f32 0.0, %v1071
  %v1073 = vpop.f32.mrb[0].mxu0
  %1074 = vmatprep.mubr.f32.mxu0 %v483
  %1075 = vmatmul.mubr.f32.gmra.mrb[0].mxu0 %v125
  %v1076 = vpop.f32.mrb[0].mxu0
  %v1077 = vadd.f32 0.0, %v1076
  %v1078 = vpop.f32.mrb[0].mxu0
  %1079 = vmatprep.mubr.f32.mxu0 %v486
  %1080 = vmatmul.mubr.f32.gmra.mrb[0].mxu0 %v127
  %v1081 = vpop.f32.mrb[0].mxu0
  %v1082 = vadd.f32 0.0, %v1081
  %v1083 = vpop.f32.mrb[0].mxu0
  %1084 = vmatprep.mubr.f32.mxu0 %v489
  %1085 = vmatmul.mubr.f32.gmra.mrb[0].mxu0 %v129
  %v1086 = vpop.f32.mrb[0].mxu0
  %v1087 = vadd.f32 0.0, %v1086
  %v1088 = vpop.f32.mrb[0].mxu0
  %1089 = vmatprep.mubr.f32.mxu0 %v492
  %1090 = vmatmul.mubr.f32.gmra.mrb[0].mxu0 %v131
  %v1091 = vpop.f32.mrb[0].mxu0
  %v1092 = vadd.f32 0.0, %v1091
  %v1093 = vpop.f32.mrb[0].mxu0
  %1094 = vmatprep.mubr.f32.mxu0 %v495
  %1095 = vmatmul.mubr.f32.gmra.mrb[0].mxu0 %v133
  %v1096 = vpop.f32.mrb[0].mxu0
  %v1097 = vadd.f32 0.0, %v1096
  %v1098 = vpop.f32.mrb[0].mxu0
  %1099 = vmatprep.mubr.f32.mxu0 %v498
  %1100 = vmatmul.mubr.f32.gmra.mrb[0].mxu0 %v135
  %v1101 = vpop.f32.mrb[0].mxu0
  %v1102 = vadd.f32 0.0, %v1101
  %v1103 = vpop.f32.mrb[0].mxu0
  %1104 = vmatprep.mubr.f32.mxu0 %v501
  %1105 = vmatmul.mubr.f32.gmra.mrb[0].mxu0 %v137
  %v1106 = vpop.f32.mrb[0].mxu0
  %v1107 = vadd.f32 0.0, %v1106
  %v1108 = vpop.f32.mrb[0].mxu0
  %1109 = vmatprep.mubr.f32.mxu0 %v504
  %1110 = vmatmul.mubr.f32.gmra.mrb[0].mxu0 %v139
  %v1111 = vpop.f32.mrb[0].mxu0
  %v1112 = vadd.f32 0.0, %v1111
  %v1113 = vpop.f32.mrb[0].mxu0
  %1114 = vmatprep.mubr.f32.mxu0 %v507
  %1115 = vmatmul.mubr.f32.gmra.mrb[0].mxu0 %v141
  %v1116 = vpop.f32.mrb[0].mxu0
  %v1117 = vadd.f32 0.0, %v1116
  %v1118 = vpop.f32.mrb[0].mxu0
  %1119 = vmatprep.mubr.f32.mxu0 %v510
  %1120 = vmatmul.mubr.f32.gmra.mrb[0].mxu0 %v143
  %v1121 = vpop.f32.mrb[0].mxu0
  %v1122 = vadd.f32 0.0, %v1121
  %v1123 = vpop.f32.mrb[0].mxu0
  %1124 = vmatprep.mubr.f32.mxu0 %v513
  %1125 = vmatmul.mubr.f32.gmra.mrb[0].mxu0 %v145
  %v1126 = vpop.f32.mrb[0].mxu0
  %v1127 = vadd.f32 0.0, %v1126
  %v1128 = vpop.f32.mrb[0].mxu0
  %1129 = vmatprep.mubr.f32.mxu0 %v516
  %1130 = vmatmul.mubr.f32.gmra.mrb[0].mxu0 %v147
  %v1131 = vpop.f32.mrb[0].mxu0
  %v1132 = vadd.f32 0.0, %v1131
  %v1133 = vpop.f32.mrb[0].mxu0
  %1134 = vmatprep.mubr.f32.mxu0 %v519
  %1135 = vmatmul.mubr.f32.gmra.mrb[0].mxu0 %v149
  %v1136 = vpop.f32.mrb[0].mxu0
  %v1137 = vadd.f32 0.0, %v1136
  %v1138 = vpop.f32.mrb[0].mxu0
  %1139 = vmatprep.mubr.f32.mxu0 %v522
  %1140 = vmatmul.mubr.f32.gmra.mrb[0].mxu0 %v151
  %v1141 = vpop.f32.mrb[0].mxu0
  %v1142 = vadd.f32 0.0, %v1141
  %v1143 = vpop.f32.mrb[0].mxu0
  %1144 = vmatprep.mubr.f32.mxu0 %v525
  %1145 = vmatmul.mubr.f32.gmra.mrb[0].mxu0 %v153
  %v1146 = vpop.f32.mrb[0].mxu0
  %v1147 = vadd.f32 0.0, %v1146
  %v1148 = vpop.f32.mrb[0].mxu0
  %1149 = vmatprep.mubr.f32.mxu0 %v528
  %1150 = vmatmul.mubr.f32.gmra.mrb[0].mxu0 %v155
  %v1151 = vpop.f32.mrb[0].mxu0
  %v1152 = vadd.f32 0.0, %v1151
  %v1153 = vpop.f32.mrb[0].mxu0
  %1154 = vmatprep.mubr.f32.mxu0 %v531
  %1155 = vmatmul.mubr.f32.gmra.mrb[0].mxu0 %v157
  %v1156 = vpop.f32.mrb[0].mxu0
  %v1157 = vadd.f32 0.0, %v1156
  %v1158 = vpop.f32.mrb[0].mxu0
  %1159 = vmatprep.mubr.f32.mxu0 %v534
  %1160 = vmatmul.mubr.f32.gmra.mrb[0].mxu0 %v159
  %v1161 = vpop.f32.mrb[0].mxu0
  %v1162 = vadd.f32 0.0, %v1161
  %v1163 = vpop.f32.mrb[0].mxu0
  %1164 = vmatprep.mubr.f32.mxu0 %v537
  %1165 = vmatmul.mubr.f32.gmra.mrb[0].mxu0 %v161
  %v1166 = vpop.f32.mrb[0].mxu0
  %v1167 = vadd.f32 0.0, %v1166
  %v1168 = vpop.f32.mrb[0].mxu0
  %1169 = vmatprep.mubr.f32.mxu0 %v540
  %1170 = vmatmul.mubr.f32.gmra.mrb[0].mxu0 %v163
  %v1171 = vpop.f32.mrb[0].mxu0
  %v1172 = vadd.f32 0.0, %v1171
  %v1173 = vpop.f32.mrb[0].mxu0
  %1174 = vmatprep.mubr.f32.mxu0 %v543
  %1175 = vmatmul.mubr.f32.gmra.mrb[0].mxu0 %v165
  %v1176 = vpop.f32.mrb[0].mxu0
  %v1177 = vadd.f32 0.0, %v1176
  %v1178 = vpop.f32.mrb[0].mxu0
  %1179 = vmatprep.mubr.f32.mxu0 %v546
  %1180 = vmatmul.mubr.f32.gmra.mrb[0].mxu0 %v167
  %v1181 = vpop.f32.mrb[0].mxu0
  %v1182 = vadd.f32 0.0, %v1181
  %v1183 = vpop.f32.mrb[0].mxu0
  %1184 = vmatprep.mubr.f32.mxu0 %v549
  %1185 = vmatmul.mubr.f32.gmra.mrb[0].mxu0 %v169
  %v1186 = vpop.f32.mrb[0].mxu0
  %v1187 = vadd.f32 0.0, %v1186
  %v1188 = vpop.f32.mrb[0].mxu0
  %1189 = vmatprep.mubr.f32.mxu0 %v552
  %1190 = vmatmul.mubr.f32.gmra.mrb[0].mxu0 %v171
  %v1191 = vpop.f32.mrb[0].mxu0
  %v1192 = vadd.f32 0.0, %v1191
  %v1193 = vpop.f32.mrb[0].mxu0
  %1194 = vmatprep.mubr.f32.mxu0 %v555
  %1195 = vmatmul.mubr.f32.gmra.mrb[0].mxu0 %v173
  %v1196 = vpop.f32.mrb[0].mxu0
  %v1197 = vadd.f32 0.0, %v1196
  %v1198 = vpop.f32.mrb[0].mxu0
  %1199 = vmatprep.mubr.f32.mxu0 %v558
  %1200 = vmatmul.mubr.f32.gmra.mrb[0].mxu0 %v175
  %v1201 = vpop.f32.mrb[0].mxu0
  %v1202 = vadd.f32 0.0, %v1201
  %v1203 = vpop.f32.mrb[0].mxu0
  %1204 = vmatprep.mubr.f32.mxu0 %v561
  %1205 = vmatmul.mubr.f32.gmra.mrb[0].mxu0 %v177
  %v1206 = vpop.f32.mrb[0].mxu0
  %v1207 = vadd.f32 0.0, %v1206
  %v1208 = vpop.f32.mrb[0].mxu0
  %1209 = vmatprep.mubr.f32.mxu0 %v564
  %1210 = vmatmul.mubr.f32.gmra.mrb[0].mxu0 %v179
  %v1211 = vpop.f32.mrb[0].mxu0
  %v1212 = vadd.f32 0.0, %v1211
  %v1213 = vpop.f32.mrb[0].mxu0
  %1214 = vmatprep.mubr.f32.mxu0 %v567
  %1215 = vmatmul.mubr.f32.gmra.mrb[0].mxu0 %v181
  %v1216 = vpop.f32.mrb[0].mxu0
  %v1217 = vadd.f32 0.0, %v1216
  %v1218 = vpop.f32.mrb[0].mxu0
  %1219 = vmatprep.mubr.f32.mxu0 %v570
  %1220 = vmatmul.mubr.f32.gmra.mrb[0].mxu0 %v183
  %v1221 = vpop.f32.mrb[0].mxu0
  %v1222 = vadd.f32 0.0, %v1221
  %v1223 = vpop.f32.mrb[0].mxu0
  %1224 = vmatprep.mubr.f32.mxu0 %v573
  %1225 = vmatmul.mubr.f32.gmra.mrb[0].mxu0 %v185
  %v1226 = vpop.f32.mrb[0].mxu0
  %v1227 = vadd.f32 0.0, %v1226
  %v1228 = vpop.f32.mrb[0].mxu0
  %1229 = vmatprep.mubr.f32.mxu0 %v576
  %1230 = vmatmul.mubr.f32.gmra.mrb[0].mxu0 %v187
  %v1231 = vpop.f32.mrb[0].mxu0
  %v1232 = vadd.f32 0.0, %v1231
  %v1233 = vpop.f32.mrb[0].mxu0
  %1234 = vmatprep.mubr.f32.mxu0 %v579
  %1235 = vmatmul.mubr.f32.gmra.mrb[0].mxu0 %v189
  %v1236 = vpop.f32.mrb[0].mxu0
  %v1237 = vadd.f32 0.0, %v1236
  %v1238 = vpop.f32.mrb[0].mxu0
  %1239 = vmatprep.mubr.f32.mxu0 %v582
  %1240 = vmatmul.mubr.f32.gmra.mrb[0].mxu0 %v191
  %v1241 = vpop.f32.mrb[0].mxu0
  %v1242 = vadd.f32 0.0, %v1241
  %v1243 = vpop.f32.mrb[0].mxu0
  %1244 = vmatprep.mubr.f32.mxu0 %v585
  %1245 = vmatmul.mubr.f32.gmra.mrb[0].mxu0 %v193
  %v1246 = vpop.f32.mrb[0].mxu0
  %v1247 = vadd.f32 0.0, %v1246
  %v1248 = vpop.f32.mrb[0].mxu0
  %1249 = vmatprep.mubr.f32.mxu0 %v588
  %1250 = vmatmul.mubr.f32.gmra.mrb[0].mxu0 %v195
  %v1251 = vpop.f32.mrb[0].mxu0
  %v1252 = vadd.f32 0.0, %v1251
  %v1253 = vpop.f32.mrb[0].mxu0
  %1254 = vmatprep.mubr.f32.mxu0 %v591
  %1255 = vmatmul.mubr.f32.gmra.mrb[0].mxu0 %v197
  %v1256 = vpop.f32.mrb[0].mxu0
  %v1257 = vadd.f32 0.0, %v1256
  %v1258 = vpop.f32.mrb[0].mxu0
  %1259 = vmatprep.mubr.f32.mxu0 %v594
  %1260 = vmatmul.mubr.f32.gmra.mrb[0].mxu0 %v199
  %v1261 = vpop.f32.mrb[0].mxu0
  %v1262 = vadd.f32 0.0, %v1261
  %v1263 = vpop.f32.mrb[0].mxu0
  %1264 = vmatprep.mubr.f32.mxu0 %v597
  %1265 = vmatmul.mubr.f32.gmra.mrb[0].mxu0 %v201
  %v1266 = vpop.f32.mrb[0].mxu0
  %v1267 = vadd.f32 0.0, %v1266
  %v1268 = vpop.f32.mrb[0].mxu0
  %1269 = vmatprep.mubr.f32.mxu0 %v600
  %1270 = vmatmul.mubr.f32.gmra.mrb[0].mxu0 %v203
  %v1271 = vpop.f32.mrb[0].mxu0
  %v1272 = vadd.f32 0.0, %v1271
  %v1273 = vpop.f32.mrb[0].mxu0
  %1274 = vmatprep.mubr.f32.mxu0 %v603
  %1275 = vmatmul.mubr.f32.gmra.mrb[0].mxu0 %v205
  %v1276 = vpop.f32.mrb[0].mxu0
  %v1277 = vadd.f32 0.0, %v1276
  %v1278 = vpop.f32.mrb[0].mxu0
  %1279 = vmatprep.mubr.f32.mxu0 %v606
  %1280 = vmatmul.mubr.f32.gmra.mrb[0].mxu0 %v207
  %v1281 = vpop.f32.mrb[0].mxu0
  %v1282 = vadd.f32 0.0, %v1281
  %v1283 = vpop.f32.mrb[0].mxu0
  %1284 = vmatprep.mubr.f32.mxu0 %v609
  %1285 = vmatmul.mubr.f32.gmra.mrb[0].mxu0 %v209
  %v1286 = vpop.f32.mrb[0].mxu0
  %v1287 = vadd.f32 0.0, %v1286
  %v1288 = vpop.f32.mrb[0].mxu0
  %1289 = vmatprep.mubr.f32.mxu0 %v612
  %1290 = vmatmul.mubr.f32.gmra.mrb[0].mxu0 %v211
  %v1291 = vpop.f32.mrb[0].mxu0
  %v1292 = vadd.f32 0.0, %v1291
  %v1293 = vpop.f32.mrb[0].mxu0
  %1294 = vmatprep.mubr.f32.mxu0 %v615
  %1295 = vmatmul.mubr.f32.gmra.mrb[0].mxu0 %v213
  %v1296 = vpop.f32.mrb[0].mxu0
  %v1297 = vadd.f32 0.0, %v1296
  %v1298 = vpop.f32.mrb[0].mxu0
  %1299 = vmatprep.mubr.f32.mxu0 %v618
  %1300 = vmatmul.mubr.f32.gmra.mrb[0].mxu0 %v215
  %v1301 = vpop.f32.mrb[0].mxu0
  %v1302 = vadd.f32 0.0, %v1301
  %v1303 = vpop.f32.mrb[0].mxu0
  %1304 = vmatprep.mubr.f32.mxu0 %v621
  %1305 = vmatmul.mubr.f32.gmra.mrb[0].mxu0 %v217
  %v1306 = vpop.f32.mrb[0].mxu0
  %v1307 = vadd.f32 0.0, %v1306
  %v1308 = vpop.f32.mrb[0].mxu0
  %1309 = vmatprep.mubr.f32.mxu0 %v624
  %1310 = vmatmul.mubr.f32.gmra.mrb[0].mxu0 %v219
  %v1311 = vpop.f32.mrb[0].mxu0
  %v1312 = vadd.f32 0.0, %v1311
  %v1313 = vpop.f32.mrb[0].mxu0
  %1314 = vmatprep.mubr.f32.mxu0 %v627
  %1315 = vmatmul.mubr.f32.gmra.mrb[0].mxu0 %v221
  %v1316 = vpop.f32.mrb[0].mxu0
  %v1317 = vadd.f32 0.0, %v1316
  %v1318 = vpop.f32.mrb[0].mxu0
  %1319 = vmatprep.mubr.f32.mxu0 %v630
  %1320 = vmatmul.mubr.f32.gmra.mrb[0].mxu0 %v223
  %v1321 = vpop.f32.mrb[0].mxu0
  %v1322 = vadd.f32 0.0, %v1321
  %v1323 = vpop.f32.mrb[0].mxu0
  %1324 = vmatprep.mubr.f32.mxu0 %v633
  %1325 = vmatmul.mubr.f32.gmra.mrb[0].mxu0 %v225
  %v1326 = vpop.f32.mrb[0].mxu0
  %v1327 = vadd.f32 0.0, %v1326
  %v1328 = vpop.f32.mrb[0].mxu0
  %1329 = vmatprep.mubr.f32.mxu0 %v636
  %1330 = vmatmul.mubr.f32.gmra.mrb[0].mxu0 %v227
  %v1331 = vpop.f32.mrb[0].mxu0
  %v1332 = vadd.f32 0.0, %v1331
  %v1333 = vpop.f32.mrb[0].mxu0
  %1334 = vmatprep.mubr.f32.mxu0 %v639
  %1335 = vmatmul.mubr.f32.gmra.mrb[0].mxu0 %v229
  %v1336 = vpop.f32.mrb[0].mxu0
  %v1337 = vadd.f32 0.0, %v1336
  %v1338 = vpop.f32.mrb[0].mxu0
  %1339 = vmatprep.mubr.f32.mxu0 %v642
  %1340 = vmatmul.mubr.f32.gmra.mrb[0].mxu0 %v231
  %v1341 = vpop.f32.mrb[0].mxu0
  %v1342 = vadd.f32 0.0, %v1341
  %v1343 = vpop.f32.mrb[0].mxu0
  %1344 = vmatprep.mubr.f32.mxu0 %v645
  %1345 = vmatmul.mubr.f32.gmra.mrb[0].mxu0 %v233
  %v1346 = vpop.f32.mrb[0].mxu0
  %v1347 = vadd.f32 0.0, %v1346
  %v1348 = vpop.f32.mrb[0].mxu0
  %1349 = vmatprep.mubr.f32.mxu0 %v648
  %1350 = vmatmul.mubr.f32.gmra.mrb[0].mxu0 %v235
  %v1351 = vpop.f32.mrb[0].mxu0
  %v1352 = vadd.f32 0.0, %v1351
  %v1353 = vpop.f32.mrb[0].mxu0
  %1354 = vmatprep.mubr.f32.mxu0 %v651
  %1355 = vmatmul.mubr.f32.gmra.mrb[0].mxu0 %v237
  %v1356 = vpop.f32.mrb[0].mxu0
  %v1357 = vadd.f32 0.0, %v1356
  %v1358 = vpop.f32.mrb[0].mxu0
  %1359 = vmatprep.mubr.f32.mxu0 %v654
  %1360 = vmatmul.mubr.f32.gmra.mrb[0].mxu0 %v239
  %v1361 = vpop.f32.mrb[0].mxu0
  %v1362 = vadd.f32 0.0, %v1361
  %v1363 = vpop.f32.mrb[0].mxu0
  %1364 = vmatprep.mubr.f32.mxu0 %v657
  %1365 = vmatmul.mubr.f32.gmra.mrb[0].mxu0 %v241
  %v1366 = vpop.f32.mrb[0].mxu0
  %v1367 = vadd.f32 0.0, %v1366
  %v1368 = vpop.f32.mrb[0].mxu0
  %1369 = vmatprep.mubr.f32.mxu0 %v660
  %1370 = vmatmul.mubr.f32.gmra.mrb[0].mxu0 %v243
  %v1371 = vpop.f32.mrb[0].mxu0
  %v1372 = vadd.f32 0.0, %v1371
  %v1373 = vpop.f32.mrb[0].mxu0
  %1374 = vmatprep.mubr.f32.mxu0 %v663
  %1375 = vmatmul.mubr.f32.gmra.mrb[0].mxu0 %v245
  %v1376 = vpop.f32.mrb[0].mxu0
  %v1377 = vadd.f32 0.0, %v1376
  %v1378 = vpop.f32.mrb[0].mxu0
  %1379 = vmatprep.mubr.f32.mxu0 %v666
  %1380 = vmatmul.mubr.f32.gmra.mrb[0].mxu0 %v247
  %v1381 = vpop.f32.mrb[0].mxu0
  %v1382 = vadd.f32 0.0, %v1381
  %v1383 = vpop.f32.mrb[0].mxu0
  %1384 = vmatprep.mubr.f32.mxu0 %v669
  %1385 = vmatmul.mubr.f32.gmra.mrb[0].mxu0 %v249
  %v1386 = vpop.f32.mrb[0].mxu0
  %v1387 = vadd.f32 0.0, %v1386
  %v1388 = vpop.f32.mrb[0].mxu0
  %1389 = vmatprep.mubr.f32.mxu0 %v672
  %1390 = vmatmul.mubr.f32.gmra.mrb[0].mxu0 %v251
  %v1391 = vpop.f32.mrb[0].mxu0
  %v1392 = vadd.f32 0.0, %v1391
  %v1393 = vpop.f32.mrb[0].mxu0
  %1394 = vmatprep.mubr.f32.mxu0 %v675
  %1395 = vmatmul.mubr.f32.gmra.mrb[0].mxu0 %v253
  %v1396 = vpop.f32.mrb[0].mxu0
  %v1397 = vadd.f32 0.0, %v1396
  %v1398 = vpop.f32.mrb[0].mxu0
  %1399 = vmatprep.mubr.f32.mxu0 %v678
  %1400 = vmatmul.mubr.f32.gmra.mrb[0].mxu0 %v255
  %v1401 = vpop.f32.mrb[0].mxu0
  %v1402 = vadd.f32 0.0, %v1401
  %v1403 = vpop.f32.mrb[0].mxu0
  %1404 = vmatprep.mubr.f32.mxu0 %v681
  %1405 = vmatmul.mubr.f32.gmra.mrb[0].mxu0 %v257
  %v1406 = vpop.f32.mrb[0].mxu0
  %v1407 = vadd.f32 0.0, %v1406
  %v1408 = vpop.f32.mrb[0].mxu0
  %1409 = vmatprep.mubr.f32.mxu0 %v684
  %1410 = vmatmul.mubr.f32.gmra.mrb[0].mxu0 %v259
  %v1411 = vpop.f32.mrb[0].mxu0
  %v1412 = vadd.f32 0.0, %v1411
  %v1413 = vpop.f32.mrb[0].mxu0
  %1414 = vmatprep.mubr.f32.mxu0 %v687
  %1415 = vmatmul.mubr.f32.gmra.mrb[0].mxu0 %v261
  %v1416 = vpop.f32.mrb[0].mxu0
  %v1417 = vadd.f32 0.0, %v1416
  %v1418 = vpop.f32.mrb[0].mxu0
  %1419 = vmatprep.mubr.f32.mxu0 %v690
  %1420 = vmatmul.mubr.f32.gmra.mrb[0].mxu0 %v263
  %v1421 = vpop.f32.mrb[0].mxu0
  %v1422 = vadd.f32 0.0, %v1421
  %v1423 = vpop.f32.mrb[0].mxu0
  %1424 = vmatprep.mubr.f32.mxu0 %v693
  %1425 = vmatmul.mubr.f32.gmra.mrb[0].mxu0 %v265
  %v1426 = vpop.f32.mrb[0].mxu0
  %v1427 = vadd.f32 0.0, %v1426
  %v1428 = vpop.f32.mrb[0].mxu0
  %1429 = vmatprep.mubr.f32.mxu0 %v696
  %1430 = vmatmul.mubr.f32.gmra.mrb[0].mxu0 %v267
  %v1431 = vpop.f32.mrb[0].mxu0
  %v1432 = vadd.f32 0.0, %v1431
  %v1433 = vpop.f32.mrb[0].mxu0
  %1434 = vmatprep.mubr.f32.mxu0 %v699
  %1435 = vmatmul.mubr.f32.gmra.mrb[0].mxu0 %v269
  %v1436 = vpop.f32.mrb[0].mxu0
  %v1437 = vadd.f32 0.0, %v1436
  %v1438 = vpop.f32.mrb[0].mxu0
  %1439 = vmatprep.mubr.f32.mxu0 %v702
  %1440 = vmatmul.mubr.f32.gmra.mrb[0].mxu0 %v271
  %v1441 = vpop.f32.mrb[0].mxu0
  %v1442 = vadd.f32 0.0, %v1441
  %v1443 = vpop.f32.mrb[0].mxu0
  %1444 = vmatprep.mubr.f32.mxu0 %v705
  %1445 = vmatmul.mubr.f32.gmra.mrb[0].mxu0 %v273
  %v1446 = vpop.f32.mrb[0].mxu0
  %v1447 = vadd.f32 0.0, %v1446
  %v1448 = vpop.f32.mrb[0].mxu0
  %1449 = vmatprep.mubr.f32.mxu0 %v708
  %1450 = vmatmul.mubr.f32.gmra.mrb[0].mxu0 %v275
  %v1451 = vpop.f32.mrb[0].mxu0
  %v1452 = vadd.f32 0.0, %v1451
  %v1453 = vpop.f32.mrb[0].mxu0
  %1454 = vmatprep.mubr.f32.mxu0 %v711
  %1455 = vmatmul.mubr.f32.gmra.mrb[0].mxu0 %v277
  %v1456 = vpop.f32.mrb[0].mxu0
  %v1457 = vadd.f32 0.0, %v1456
  %v1458 = vpop.f32.mrb[0].mxu0
  %1459 = vmatprep.mubr.f32.mxu0 %v714
  %1460 = vmatmul.mubr.f32.gmra.mrb[0].mxu0 %v279
  %v1461 = vpop.f32.mrb[0].mxu0
  %v1462 = vadd.f32 0.0, %v1461
  %v1463 = vpop.f32.mrb[0].mxu0
  %1464 = vmatprep.mubr.f32.mxu0 %v717
  %1465 = vmatmul.mubr.f32.gmra.mrb[0].mxu0 %v281
  %v1466 = vpop.f32.mrb[0].mxu0
  %v1467 = vadd.f32 0.0, %v1466
  %v1468 = vpop.f32.mrb[0].mxu0
  %1469 = vmatprep.mubr.f32.mxu0 %v720
  %1470 = vmatmul.mubr.f32.gmra.mrb[0].mxu0 %v283
  %v1471 = vpop.f32.mrb[0].mxu0
  %v1472 = vadd.f32 0.0, %v1471
  %v1473 = vpop.f32.mrb[0].mxu0
  %1474 = vmatprep.mubr.f32.mxu0 %v723
  %1475 = vmatmul.mubr.f32.gmra.mrb[0].mxu0 %v285
  %v1476 = vpop.f32.mrb[0].mxu0
  %v1477 = vadd.f32 0.0, %v1476
  %v1478 = vpop.f32.mrb[0].mxu0
  %1479 = vdwg.mxu0
  %vm1480 = vcmask 400384
  %1481 = vst.msk [vmem:[%s2] sm:$0xff] %vm1480, %v792
  %1482 = vst.msk [vmem:[%s2 + $0x8] sm:$0xff] %vm1480, %v797
  %1483 = vst.msk [vmem:[%s2 + $0x10] sm:$0xff] %vm1480, %v802
  %1484 = vst.msk [vmem:[%s2 + $0x18] sm:$0xff] %vm1480, %v807
  %1485 = vst.msk [vmem:[%s2 + $0x20] sm:$0xff] %vm1480, %v812
  %1486 = vst.msk [vmem:[%s2 + $0x28] sm:$0xff] %vm1480, %v817
  %1487 = vst.msk [vmem:[%s2 + $0x30] sm:$0xff] %vm1480, %v822
  %1488 = vst.msk [vmem:[%s2 + $0x38] sm:$0xff] %vm1480, %v827
  %1489 = vst.msk [vmem:[%s2 + $0x40] sm:$0xff] %vm1480, %v832
  %1490 = vst.msk [vmem:[%s2 + $0x48] sm:$0xff] %vm1480, %v837
  %1491 = vst.msk [vmem:[%s2 + $0x50] sm:$0xff] %vm1480, %v842
  %1492 = vst.msk [vmem:[%s2 + $0x58] sm:$0xff] %vm1480, %v847
  %1493 = vst.msk [vmem:[%s2 + $0x60] sm:$0xff] %vm1480, %v852
  %1494 = vst.msk [vmem:[%s2 + $0x68] sm:$0xff] %vm1480, %v857
  %1495 = vst.msk [vmem:[%s2 + $0x70] sm:$0xff] %vm1480, %v862
  %1496 = vst.msk [vmem:[%s2 + $0x78] sm:$0xff] %vm1480, %v867
  %1497 = vst.msk [vmem:[%s2 + $0x80] sm:$0xff] %vm1480, %v872
  %1498 = vst.msk [vmem:[%s2 + $0x88] sm:$0xff] %vm1480, %v877
  %1499 = vst.msk [vmem:[%s2 + $0x90] sm:$0xff] %vm1480, %v882
  %1500 = vst.msk [vmem:[%s2 + $0x98] sm:$0xff] %vm1480, %v887
  %1501 = vst.msk [vmem:[%s2 + $0xa0] sm:$0xff] %vm1480, %v892
  %1502 = vst.msk [vmem:[%s2 + $0xa8] sm:$0xff] %vm1480, %v897
  %1503 = vst.msk [vmem:[%s2 + $0xb0] sm:$0xff] %vm1480, %v902
  %1504 = vst.msk [vmem:[%s2 + $0xb8] sm:$0xff] %vm1480, %v907
  %1505 = vst.msk [vmem:[%s2 + $0xc0] sm:$0xff] %vm1480, %v912
  %1506 = vst.msk [vmem:[%s2 + $0xc8] sm:$0xff] %vm1480, %v917
  %1507 = vst.msk [vmem:[%s2 + $0xd0] sm:$0xff] %vm1480, %v922
  %1508 = vst.msk [vmem:[%s2 + $0xd8] sm:$0xff] %vm1480, %v927
  %1509 = vst.msk [vmem:[%s2 + $0xe0] sm:$0xff] %vm1480, %v932
  %1510 = vst.msk [vmem:[%s2 + $0xe8] sm:$0xff] %vm1480, %v937
  %1511 = vst.msk [vmem:[%s2 + $0xf0] sm:$0xff] %vm1480, %v942
  %1512 = vst.msk [vmem:[%s2 + $0xf8] sm:$0xff] %vm1480, %v947
  %1513 = vst.msk [vmem:[%s2 + $0x100] sm:$0xff] %vm1480, %v952
  %1514 = vst.msk [vmem:[%s2 + $0x108] sm:$0xff] %vm1480, %v957
  %1515 = vst.msk [vmem:[%s2 + $0x110] sm:$0xff] %vm1480, %v962
  %1516 = vst.msk [vmem:[%s2 + $0x118] sm:$0xff] %vm1480, %v967
  %1517 = vst.msk [vmem:[%s2 + $0x120] sm:$0xff] %vm1480, %v972
  %1518 = vst.msk [vmem:[%s2 + $0x128] sm:$0xff] %vm1480, %v977
  %1519 = vst.msk [vmem:[%s2 + $0x130] sm:$0xff] %vm1480, %v982
  %1520 = vst.msk [vmem:[%s2 + $0x138] sm:$0xff] %vm1480, %v987
  %1521 = vst.msk [vmem:[%s2 + $0x140] sm:$0xff] %vm1480, %v992
  %1522 = vst.msk [vmem:[%s2 + $0x148] sm:$0xff] %vm1480, %v997
  %1523 = vst.msk [vmem:[%s2 + $0x150] sm:$0xff] %vm1480, %v1002
  %1524 = vst.msk [vmem:[%s2 + $0x158] sm:$0xff] %vm1480, %v1007
  %1525 = vst.msk [vmem:[%s2 + $0x160] sm:$0xff] %vm1480, %v1012
  %1526 = vst.msk [vmem:[%s2 + $0x168] sm:$0xff] %vm1480, %v1017
  %1527 = vst.msk [vmem:[%s2 + $0x170] sm:$0xff] %vm1480, %v1022
  %1528 = vst.msk [vmem:[%s2 + $0x178] sm:$0xff] %vm1480, %v1027
  %1529 = vst.msk [vmem:[%s2 + $0x180] sm:$0xff] %vm1480, %v1032
  %1530 = vst.msk [vmem:[%s2 + $0x188] sm:$0xff] %vm1480, %v1037
  %1531 = vst.msk [vmem:[%s2 + $0x190] sm:$0xff] %vm1480, %v1042
  %1532 = vst.msk [vmem:[%s2 + $0x198] sm:$0xff] %vm1480, %v1047
  %1533 = vst.msk [vmem:[%s2 + $0x1a0] sm:$0xff] %vm1480, %v1052
  %1534 = vst.msk [vmem:[%s2 + $0x1a8] sm:$0xff] %vm1480, %v1057
  %1535 = vst.msk [vmem:[%s2 + $0x1b0] sm:$0xff] %vm1480, %v1062
  %1536 = vst.msk [vmem:[%s2 + $0x1b8] sm:$0xff] %vm1480, %v1067
  %1537 = vst.msk [vmem:[%s2 + $0x1c0] sm:$0xff] %vm1480, %v1072
  %1538 = vst.msk [vmem:[%s2 + $0x1c8] sm:$0xff] %vm1480, %v1077
  %1539 = vst.msk [vmem:[%s2 + $0x1d0] sm:$0xff] %vm1480, %v1082
  %1540 = vst.msk [vmem:[%s2 + $0x1d8] sm:$0xff] %vm1480, %v1087
  %1541 = vst.msk [vmem:[%s2 + $0x1e0] sm:$0xff] %vm1480, %v1092
  %1542 = vst.msk [vmem:[%s2 + $0x1e8] sm:$0xff] %vm1480, %v1097
  %1543 = vst.msk [vmem:[%s2 + $0x1f0] sm:$0xff] %vm1480, %v1102
  %1544 = vst.msk [vmem:[%s2 + $0x1f8] sm:$0xff] %vm1480, %v1107
  %1545 = vst.msk [vmem:[%s2 + $0x200] sm:$0xff] %vm1480, %v1112
  %1546 = vst.msk [vmem:[%s2 + $0x208] sm:$0xff] %vm1480, %v1117
  %1547 = vst.msk [vmem:[%s2 + $0x210] sm:$0xff] %vm1480, %v1122
  %1548 = vst.msk [vmem:[%s2 + $0x218] sm:$0xff] %vm1480, %v1127
  %1549 = vst.msk [vmem:[%s2 + $0x220] sm:$0xff] %vm1480, %v1132
  %1550 = vst.msk [vmem:[%s2 + $0x228] sm:$0xff] %vm1480, %v1137
  %1551 = vst.msk [vmem:[%s2 + $0x230] sm:$0xff] %vm1480, %v1142
  %1552 = vst.msk [vmem:[%s2 + $0x238] sm:$0xff] %vm1480, %v1147
  %1553 = vst.msk [vmem:[%s2 + $0x240] sm:$0xff] %vm1480, %v1152
  %1554 = vst.msk [vmem:[%s2 + $0x248] sm:$0xff] %vm1480, %v1157
  %1555 = vst.msk [vmem:[%s2 + $0x250] sm:$0xff] %vm1480, %v1162
  %1556 = vst.msk [vmem:[%s2 + $0x258] sm:$0xff] %vm1480, %v1167
  %1557 = vst.msk [vmem:[%s2 + $0x260] sm:$0xff] %vm1480, %v1172
  %1558 = vst.msk [vmem:[%s2 + $0x268] sm:$0xff] %vm1480, %v1177
  %1559 = vst.msk [vmem:[%s2 + $0x270] sm:$0xff] %vm1480, %v1182
  %1560 = vst.msk [vmem:[%s2 + $0x278] sm:$0xff] %vm1480, %v1187
  %1561 = vst.msk [vmem:[%s2 + $0x280] sm:$0xff] %vm1480, %v1192
  %1562 = vst.msk [vmem:[%s2 + $0x288] sm:$0xff] %vm1480, %v1197
  %1563 = vst.msk [vmem:[%s2 + $0x290] sm:$0xff] %vm1480, %v1202
  %1564 = vst.msk [vmem:[%s2 + $0x298] sm:$0xff] %vm1480, %v1207
  %1565 = vst.msk [vmem:[%s2 + $0x2a0] sm:$0xff] %vm1480, %v1212
  %1566 = vst.msk [vmem:[%s2 + $0x2a8] sm:$0xff] %vm1480, %v1217
  %1567 = vst.msk [vmem:[%s2 + $0x2b0] sm:$0xff] %vm1480, %v1222
  %1568 = vst.msk [vmem:[%s2 + $0x2b8] sm:$0xff] %vm1480, %v1227
  %1569 = vst.msk [vmem:[%s2 + $0x2c0] sm:$0xff] %vm1480, %v1232
  %1570 = vst.msk [vmem:[%s2 + $0x2c8] sm:$0xff] %vm1480, %v1237
  %1571 = vst.msk [vmem:[%s2 + $0x2d0] sm:$0xff] %vm1480, %v1242
  %1572 = vst.msk [vmem:[%s2 + $0x2d8] sm:$0xff] %vm1480, %v1247
  %1573 = vst.msk [vmem:[%s2 + $0x2e0] sm:$0xff] %vm1480, %v1252
  %1574 = vst.msk [vmem:[%s2 + $0x2e8] sm:$0xff] %vm1480, %v1257
  %1575 = vst.msk [vmem:[%s2 + $0x2f0] sm:$0xff] %vm1480, %v1262
  %1576 = vst.msk [vmem:[%s2 + $0x2f8] sm:$0xff] %vm1480, %v1267
  %1577 = vst.msk [vmem:[%s2 + $0x300] sm:$0xff] %vm1480, %v1272
  %1578 = vst.msk [vmem:[%s2 + $0x308] sm:$0xff] %vm1480, %v1277
  %1579 = vst.msk [vmem:[%s2 + $0x310] sm:$0xff] %vm1480, %v1282
  %1580 = vst.msk [vmem:[%s2 + $0x318] sm:$0xff] %vm1480, %v1287
  %1581 = vst.msk [vmem:[%s2 + $0x320] sm:$0xff] %vm1480, %v1292
  %1582 = vst.msk [vmem:[%s2 + $0x328] sm:$0xff] %vm1480, %v1297
  %1583 = vst.msk [vmem:[%s2 + $0x330] sm:$0xff] %vm1480, %v1302
  %1584 = vst.msk [vmem:[%s2 + $0x338] sm:$0xff] %vm1480, %v1307
  %1585 = vst.msk [vmem:[%s2 + $0x340] sm:$0xff] %vm1480, %v1312
  %1586 = vst.msk [vmem:[%s2 + $0x348] sm:$0xff] %vm1480, %v1317
  %1587 = vst.msk [vmem:[%s2 + $0x350] sm:$0xff] %vm1480, %v1322
  %1588 = vst.msk [vmem:[%s2 + $0x358] sm:$0xff] %vm1480, %v1327
  %1589 = vst.msk [vmem:[%s2 + $0x360] sm:$0xff] %vm1480, %v1332
  %1590 = vst.msk [vmem:[%s2 + $0x368] sm:$0xff] %vm1480, %v1337
  %1591 = vst.msk [vmem:[%s2 + $0x370] sm:$0xff] %vm1480, %v1342
  %1592 = vst.msk [vmem:[%s2 + $0x378] sm:$0xff] %vm1480, %v1347
  %1593 = vst.msk [vmem:[%s2 + $0x380] sm:$0xff] %vm1480, %v1352
  %1594 = vst.msk [vmem:[%s2 + $0x388] sm:$0xff] %vm1480, %v1357
  %1595 = vst.msk [vmem:[%s2 + $0x390] sm:$0xff] %vm1480, %v1362
  %1596 = vst.msk [vmem:[%s2 + $0x398] sm:$0xff] %vm1480, %v1367
  %1597 = vst.msk [vmem:[%s2 + $0x3a0] sm:$0xff] %vm1480, %v1372
  %1598 = vst.msk [vmem:[%s2 + $0x3a8] sm:$0xff] %vm1480, %v1377
  %1599 = vst.msk [vmem:[%s2 + $0x3b0] sm:$0xff] %vm1480, %v1382
  %1600 = vst.msk [vmem:[%s2 + $0x3b8] sm:$0xff] %vm1480, %v1387
  %1601 = vst.msk [vmem:[%s2 + $0x3c0] sm:$0xff] %vm1480, %v1392
  %1602 = vst.msk [vmem:[%s2 + $0x3c8] sm:$0xff] %vm1480, %v1397
  %1603 = vst.msk [vmem:[%s2 + $0x3d0] sm:$0xff] %vm1480, %v1402
  %1604 = vst.msk [vmem:[%s2 + $0x3d8] sm:$0xff] %vm1480, %v1407
  %1605 = vst.msk [vmem:[%s2 + $0x3e0] sm:$0xff] %vm1480, %v1412
  %1606 = vst.msk [vmem:[%s2 + $0x3e8] sm:$0xff] %vm1480, %v1417
  %1607 = vst.msk [vmem:[%s2 + $0x3f0] sm:$0xff] %vm1480, %v1422
  %1608 = vst.msk [vmem:[%s2 + $0x3f8] sm:$0xff] %vm1480, %v1427
  %1609 = vst.msk [vmem:[%s2 + $0x400] sm:$0xff] %vm1480, %v1432
  %1610 = vst.msk [vmem:[%s2 + $0x408] sm:$0xff] %vm1480, %v1437
  %1611 = vst.msk [vmem:[%s2 + $0x410] sm:$0xff] %vm1480, %v1442
  %1612 = vst.msk [vmem:[%s2 + $0x418] sm:$0xff] %vm1480, %v1447
  %1613 = vst.msk [vmem:[%s2 + $0x420] sm:$0xff] %vm1480, %v1452
  %1614 = vst.msk [vmem:[%s2 + $0x428] sm:$0xff] %vm1480, %v1457
  %1615 = vst.msk [vmem:[%s2 + $0x430] sm:$0xff] %vm1480, %v1462
  %1616 = vst.msk [vmem:[%s2 + $0x438] sm:$0xff] %vm1480, %v1467
  %1617 = vst.msk [vmem:[%s2 + $0x440] sm:$0xff] %vm1480, %v1472
  %1618 = vst.msk [vmem:[%s2 + $0x448] sm:$0xff] %vm1480, %v1477
  // Predicated region
  $region10: #{conv2d_1x1.1} parent=0 // pred_check
    _
  $region11: #{conv2d_1x1.1} parent=0 // pred_check_branch
    %1620 = sbr.rel (0) target = $region13
  $region12: #{conv2d_1x1.1} parent=0 // pred_region
    _
  $region13: #{conv2d_1x1.1} parent=0 // pred_fallthru
    _
  // Predicated region
  $region14: #{conv2d_1x1.1} parent=0 // pred_check
    _
  $region15: #{conv2d_1x1.1} parent=0 // pred_check_branch
    %1622 = sbr.rel (0) target = $region17
  $region16: #{conv2d_1x1.1} parent=0 // pred_region
    _
  $region17: #{conv2d_1x1.1} parent=0 // pred_fallthru
    _

</llo_original>
